<compile_context>
chip_gen: v7x
topology: tpu7x:2x2x1
jax: 0.10.0
libtpu: 0.0.40
codegen_flags: <defaults>
</compile_context>

<pallas_src>
import jax
import jax.numpy as jnp
from jax.experimental import pallas as pl
from jax.experimental.pallas import tpu as pltpu

NUM_CLASSES = 10  # stand-in for config.NUM_CLASSES


# ----------------------------------------------------------------------------
# Helpers
# ----------------------------------------------------------------------------
def _round_up(x, m):
    return -(-x // m) * m


def _pick_tile(dim, tmax, align=128):
    # Full dim if it fits in one aligned tile; otherwise split into >= 2 tiles
    # (so v7x's two TensorCores both get work) aligned to `align`, capped at tmax.
    if dim <= align:
        return dim
    return max(align, min(_round_up(tmax, align), _round_up(-(-dim // 2), align)))


def _pad2d(m, rows, cols):
    return jnp.pad(m, ((0, rows - m.shape[0]), (0, cols - m.shape[1])))


# ----------------------------------------------------------------------------
# Pallas kernels
# ----------------------------------------------------------------------------
def _conv_pool_kernel(a_ref, w_ref, b_ref, o_ref):
    # a: (4, K, TM) bf16 transposed patch tiles (one per 2x2 pool offset), M on lanes.
    # w: (Cout, K) bf16   b: (Cout, 1) f32   o: (Cout, TM) -- lane-dense store.
    w = w_ref[...]
    acc = jnp.dot(w, a_ref[0], preferred_element_type=jnp.float32)
    for q in range(1, 4):
        acc = jnp.maximum(acc, jnp.dot(w, a_ref[q], preferred_element_type=jnp.float32))
    o_ref[...] = jnp.maximum(acc + b_ref[...], 0.0).astype(o_ref.dtype)


def _mlp_head_kernel(x_ref, w1_ref, b1_ref, w2_ref, b2_ref, w3_ref, b3_ref,
                     r_ref, y_ref):
    # Fused fc1 -> relu -> fc2 -> relu -> fc3; intermediates stay in VMEM/vregs.
    # All hidden/output dims are zero-padded to 128 -> unmasked lane-dense stores.
    h = jnp.dot(x_ref[...], w1_ref[...], preferred_element_type=jnp.float32) + b1_ref[...]
    h = jnp.maximum(h, 0.0)
    r = jnp.dot(h, w2_ref[...], preferred_element_type=jnp.float32) + b2_ref[...]
    r = jnp.maximum(r, 0.0)
    y = jnp.dot(r, w3_ref[...], preferred_element_type=jnp.float32) + b3_ref[...]
    r_ref[...] = r.astype(r_ref.dtype)
    y_ref[...] = y.astype(y_ref.dtype)


def _linear_kernel(x_ref, w_ref, b_ref, o_ref):
    o_ref[...] = (jnp.dot(x_ref[...], w_ref[...], preferred_element_type=jnp.float32)
                  + b_ref[...]).astype(o_ref.dtype)


# ----------------------------------------------------------------------------
# Pallas wrappers (grids / BlockSpecs)
# ----------------------------------------------------------------------------
def _im2colT_pooled(x_c, kh, kw, dy, dx, hp, wp):
    # x_c: (C, N, H, W) C-major slab.  Transposed patch matrix for pool offset (dy, dx):
    #   out[(c, i, j), (n, hp_, wp_)] = x_c[c, n, 2*hp_ + dy + i, 2*wp_ + dx + j]
    C, N, _, _ = x_c.shape
    cols = []
    for i in range(kh):
        for j in range(kw):
            cols.append(x_c[:, :, dy + i: dy + i + 2 * hp: 2,
                            dx + j: dx + j + 2 * wp: 2])        # (C, N, hp, wp)
    p = jnp.stack(cols, axis=1)                                  # (C, kh*kw, N, hp, wp)
    return p.reshape(C * kh * kw, N * hp * wp)


def conv_relu_pool(x_c, w, b, *, tm=2048, out_dtype=jnp.float32):
    # x_c: (Cin, N, H, W); w: (Cout, Cin, KH, KW); b: (Cout,)
    # VALID conv stride 1, ReLU, MaxPool2d(2,2). Returns C-major slab (Cout, N*Hp*Wp).
    cin, N, H, W = x_c.shape
    cout, cin2, kh, kw = w.shape
    assert cin == cin2
    hp, wp = (H - kh + 1) // 2, (W - kw + 1) // 2
    M = N * hp * wp
    K = cin * kh * kw

    # bf16 streaming, f32 accumulation; single stacked (4, K, M) patch array.
    x16 = x_c.astype(jnp.bfloat16)
    a = jnp.stack([_im2colT_pooled(x16, kh, kw, dy, dx, hp, wp)
                   for dy in (0, 1) for dx in (0, 1)], axis=0)   # (4, K, M) bf16
    w2d = w.reshape(cout, K).astype(jnp.bfloat16)                # PyTorch (Cin,KH,KW) flatten
    b2d = b.reshape(cout, 1).astype(jnp.float32)

    TM = _pick_tile(M, tm)                                       # >=2 tiles when M > 128
    grid = (pl.cdiv(M, TM),)
    cost = pl.CostEstimate(
        flops=int(2 * 4 * K * cout * M),
        transcendentals=0,
        bytes_accessed=int(2 * 4 * K * M + 2 * cout * K + 4 * cout
                           + jnp.dtype(out_dtype).itemsize * cout * M),
    )
    return pl.pallas_call(
        _conv_pool_kernel,
        out_shape=jax.ShapeDtypeStruct((cout, M), out_dtype),
        grid_spec=pltpu.PrefetchScalarGridSpec(
            num_scalar_prefetch=0,
            grid=grid,
            in_specs=[pl.BlockSpec((4, K, TM), lambda i: (0, 0, i)),   # one DMA stream
                      pl.BlockSpec((cout, K), lambda i: (0, 0)),       # resident weights
                      pl.BlockSpec((cout, 1), lambda i: (0, 0))],      # resident bias
            out_specs=pl.BlockSpec((cout, TM), lambda i: (0, i)),
        ),
        compiler_params=pltpu.CompilerParams(dimension_semantics=("parallel",)),
        cost_estimate=cost,
    )(a, w2d, b2d)


def mlp_head(x, fc1_w, fc1_b, fc2_w, fc2_b, fc3_w, fc3_b, *, tb=256):
    # x: (N, 400) f32; fc*_w are PyTorch (out, in).  Hidden/output dims are zero-padded
    # to 128 (exact: pad rows of the next weight are zero) -> unmasked lane-dense stores.
    N, K = x.shape
    d1, d2, d3 = fc1_w.shape[0], fc2_w.shape[0], fc3_w.shape[0]
    D = 128
    w1t = _pad2d(fc1_w.T.astype(jnp.float32), K, D)      # (400, 128)
    w2t = _pad2d(fc2_w.T.astype(jnp.float32), D, D)      # (128, 128)
    w3t = _pad2d(fc3_w.T.astype(jnp.float32), D, D)      # (128, 128)
    b1 = jnp.pad(fc1_b, (0, D - d1)).reshape(1, D)
    b2 = jnp.pad(fc2_b, (0, D - d2)).reshape(1, D)
    b3 = jnp.pad(fc3_b, (0, D - d3)).reshape(1, D)

    TB = _pick_tile(N, tb)
    grid = (pl.cdiv(N, TB),)
    cost = pl.CostEstimate(
        flops=int(2 * N * (K * D + D * D + D * D)),
        transcendentals=0,
        bytes_accessed=int(4 * (N * K + K * D + 2 * D * D + 3 * D + 2 * N * D)),
    )
    r_pad, y_pad = pl.pallas_call(
        _mlp_head_kernel,
        out_shape=(jax.ShapeDtypeStruct((N, D), jnp.float32),
                   jax.ShapeDtypeStruct((N, D), jnp.float32)),
        grid_spec=pltpu.PrefetchScalarGridSpec(
            num_scalar_prefetch=0,
            grid=grid,
            in_specs=[pl.BlockSpec((TB, K), lambda i: (i, 0)),
                      pl.BlockSpec((K, D), lambda i: (0, 0)),
                      pl.BlockSpec((1, D), lambda i: (0, 0)),
                      pl.BlockSpec((D, D), lambda i: (0, 0)),
                      pl.BlockSpec((1, D), lambda i: (0, 0)),
                      pl.BlockSpec((D, D), lambda i: (0, 0)),
                      pl.BlockSpec((1, D), lambda i: (0, 0))],
            out_specs=[pl.BlockSpec((TB, D), lambda i: (i, 0)),
                       pl.BlockSpec((TB, D), lambda i: (i, 0))],
        ),
        compiler_params=pltpu.CompilerParams(dimension_semantics=("parallel",)),
        cost_estimate=cost,
    )(x, w1t, b1, w2t, b2, w3t, b3)
    return r_pad[:, :d2], y_pad[:, :d3]


def linear(x, w, b, *, tb=256):
    # Standalone fc3 for the mapping() path. x: (N, K); w: PyTorch (D, K); b: (D,)
    N, K = x.shape
    D = w.shape[0]
    w_t = w.T.astype(jnp.float32)
    TB = _pick_tile(N, tb)
    grid = (pl.cdiv(N, TB),)
    return pl.pallas_call(
        _linear_kernel,
        out_shape=jax.ShapeDtypeStruct((N, D), jnp.float32),
        grid_spec=pltpu.PrefetchScalarGridSpec(
            num_scalar_prefetch=0,
            grid=grid,
            in_specs=[pl.BlockSpec((TB, K), lambda i: (i, 0)),
                      pl.BlockSpec((K, D), lambda i: (0, 0)),
                      pl.BlockSpec((1, D), lambda i: (0, 0))],
            out_specs=pl.BlockSpec((TB, D), lambda i: (i, 0)),
        ),
        compiler_params=pltpu.CompilerParams(dimension_semantics=("parallel",)),
    )(x, w_t, b.reshape(1, D))


# ----------------------------------------------------------------------------
# Model forward (matches CNNCifar.forward / CNNCifar.mapping semantics)
# ----------------------------------------------------------------------------
def cnn_cifar_forward(params, x):
    # x: (N, 3, 32, 32) float32 NCHW — the start_layer_idx >= 0 path.
    N = x.shape[0]
    x_c = jnp.transpose(x, (1, 0, 2, 3))            # one boundary transpose -> (3, N, 32, 32)

    # Pad conv1 Cout 6->8 with zero filters / zero bias, and conv2 Cin 6->8 with zero
    # weight columns: exact, and conv stores become sublane-unmasked.
    c1w = jnp.pad(params['conv1_w'], ((0, 2), (0, 0), (0, 0), (0, 0)))
    c1b = jnp.pad(params['conv1_b'], (0, 2))
    c2w = jnp.pad(params['conv2_w'], ((0, 0), (0, 2), (0, 0), (0, 0)))

    h1 = conv_relu_pool(x_c, c1w, c1b, out_dtype=jnp.bfloat16)        # (8, N*14*14) bf16
    h1 = h1.reshape(8, N, 14, 14)                                      # C-major slab, no transpose
    h2 = conv_relu_pool(h1, c2w, params['conv2_b'],
                        out_dtype=jnp.float32)                         # (16, N*5*5) f32

    act = jnp.transpose(h2.reshape(16, N, 5, 5), (1, 0, 2, 3))         # (N,16,5,5) NCHW (required)
    hint = act.reshape(N, 16 * 5 * 5)                                  # == x.view(-1, 400)

    r, out = mlp_head(hint,
                      params['fc1_w'], params['fc1_b'],
                      params['fc2_w'], params['fc2_b'],
                      params['fc3_w'], params['fc3_b'])

    return {'activation': act, 'hint': hint, 'representation': r, 'output': out}


def cnn_cifar_mapping(params, z, logit=True):
    # start_layer_idx < 0 path: only fc3.
    out = linear(z, params['fc3_w'], params['fc3_b'])
    result = {'output': out}
    if logit:
        result['logit'] = out
    return result


# ----------------------------------------------------------------------------
# Deterministic parameter init (PyTorch-like shapes; (out, in) Linear weights)
# ----------------------------------------------------------------------------
def init_params(key):
    ks = jax.random.split(key, 10)

    def u(k, shape, fan_in):
        bound = 1.0 / (fan_in ** 0.5)
        return jax.random.uniform(k, shape, jnp.float32, -bound, bound)

    return {
        'conv1_w': u(ks[0], (6, 3, 5, 5), 3 * 25),
        'conv1_b': u(ks[1], (6,), 3 * 25),
        'conv2_w': u(ks[2], (16, 6, 5, 5), 6 * 25),
        'conv2_b': u(ks[3], (16,), 6 * 25),
        'fc1_w': u(ks[4], (120, 16 * 5 * 5), 16 * 5 * 5),
        'fc1_b': u(ks[5], (120,), 16 * 5 * 5),
        'fc2_w': u(ks[6], (84, 120), 120),
        'fc2_b': u(ks[7], (84,), 120),
        'fc3_w': u(ks[8], (NUM_CLASSES, 84), 84),
        'fc3_b': u(ks[9], (NUM_CLASSES,), 84),
    }


# ----------------------------------------------------------------------------
# Pure-JAX f32 reference (sanity check of the Pallas path)
# ----------------------------------------------------------------------------
def reference_output(params, x):
    def conv(x, w, b):
        y = jax.lax.conv_general_dilated(
            x, w, window_strides=(1, 1), padding='VALID',
            dimension_numbers=('NCHW', 'OIHW', 'NCHW'),
            precision=jax.lax.Precision.HIGHEST)
        return jax.nn.relu(y + b[None, :, None, None])

    def pool(x):
        return jax.lax.reduce_window(x, -jnp.inf, jax.lax.max,
                                     (1, 1, 2, 2), (1, 1, 2, 2), 'VALID')

    h = pool(conv(x, params['conv1_w'], params['conv1_b']))
    h = pool(conv(h, params['conv2_w'], params['conv2_b']))
    f = h.reshape(-1, 16 * 5 * 5)
    r = jax.nn.relu(f @ params['fc1_w'].T + params['fc1_b'])
    r = jax.nn.relu(r @ params['fc2_w'].T + params['fc2_b'])
    return r @ params['fc3_w'].T + params['fc3_b']


if __name__ == "__main__":
    key = jax.random.PRNGKey(0)
    pkey, xkey = jax.random.split(key)
    params = init_params(pkey)
    # CIFAR-shaped input (batch=2); 32x32 spatial is required by the 16*5*5 flatten.
    x = jax.random.normal(xkey, (2, 3, 32, 32), dtype=jnp.float32)

    result = jax.jit(cnn_cifar_forward)(params, x)
    jax.block_until_ready(result)

    assert result['activation'].shape == (2, 16, 5, 5)
    assert result['hint'].shape == (2, 400)
    assert result['representation'].shape == (2, 84)
    assert result['output'].shape == (2, NUM_CLASSES)

    # bf16 streaming (f32 accumulation) on the conv path -> compare with a loose-ish
    # but still structure-verifying tolerance against the pure-f32 reference.
    ref = reference_output(params, x)
    assert jnp.allclose(result['output'], ref, atol=5e-2, rtol=5e-2), \
        "Pallas output mismatch vs pure-JAX reference"

    # mapping() path (start_layer_idx < 0): fc3 only, must match the fused head's fc3.
    mres = jax.jit(lambda p, z: cnn_cifar_mapping(p, z, logit=True))(
        params, result['representation'])
    jax.block_until_ready(mres)
    assert mres['output'].shape == (2, NUM_CLASSES)
    assert mres['logit'].shape == (2, NUM_CLASSES)
    assert jnp.allclose(mres['output'], result['output'], atol=2e-3, rtol=2e-3)

    print("KERNEL_OK")
</pallas_src>

<mosaic_0001>
module attributes {stable_mosaic.version = 11 : i64} {
  func.func @_conv_pool_kernel(%arg0: i32, %arg1: memref<4x75x256xbf16, #tpu.memory_space<vmem>>, %arg2: memref<8x75xbf16, #tpu.memory_space<vmem>>, %arg3: memref<8x1xf32, #tpu.memory_space<vmem>>, %arg4: memref<8x256xbf16, #tpu.memory_space<vmem>>) attributes {dimension_semantics = [#tpu.dimension_semantics<parallel>], iteration_bounds = array<i64: 2>, scalar_prefetch = 0 : i64, scratch_operands = 0 : i64, tpu.core_type = #tpu.core_type<tc>, window_params = [{transform_indices = @transform_0, window_bounds = array<i64: 4, 75, 256>}, {pipeline_mode = #tpu.pipeline_mode<synchronous>, transform_indices = @transform_1, window_bounds = array<i64: 8, 75>}, {pipeline_mode = #tpu.pipeline_mode<synchronous>, transform_indices = @transform_2, window_bounds = array<i64: 8, 1>}, {transform_indices = @transform_3, window_bounds = array<i64: 8, 256>}]} {
    %c0 = arith.constant 0 : index
    %c0_0 = arith.constant 0 : index
    %0 = vector.load %arg2[%c0, %c0_0] : memref<8x75xbf16, #tpu.memory_space<vmem>>, vector<8x75xbf16>
    %c0_1 = arith.constant 0 : index
    %c0_2 = arith.constant 0 : index
    %c0_3 = arith.constant 0 : index
    %1 = vector.load %arg1[%c0_1, %c0_2, %c0_3] : memref<4x75x256xbf16, #tpu.memory_space<vmem>>, vector<1x75x256xbf16>
    %2 = vector.shape_cast %1 : vector<1x75x256xbf16> to vector<75x256xbf16>
    %cst = arith.constant dense<0.000000e+00> : vector<8x256xf32>
    %3 = tpu.matmul %0, %2, %cst {dimension_numbers = #tpu.dot_dimension_numbers<[1], [0], [0], [1], [0, 0, 1, 1], [], []>} : vector<8x75xbf16>, vector<75x256xbf16>, vector<8x256xf32> -> vector<8x256xf32>
    %c1 = arith.constant 1 : index
    %c0_4 = arith.constant 0 : index
    %c0_5 = arith.constant 0 : index
    %4 = vector.load %arg1[%c1, %c0_4, %c0_5] : memref<4x75x256xbf16, #tpu.memory_space<vmem>>, vector<1x75x256xbf16>
    %5 = vector.shape_cast %4 : vector<1x75x256xbf16> to vector<75x256xbf16>
    %cst_6 = arith.constant dense<0.000000e+00> : vector<8x256xf32>
    %6 = tpu.matmul %0, %5, %cst_6 {dimension_numbers = #tpu.dot_dimension_numbers<[1], [0], [0], [1], [0, 0, 1, 1], [], []>} : vector<8x75xbf16>, vector<75x256xbf16>, vector<8x256xf32> -> vector<8x256xf32>
    %7 = arith.maximumf %3, %6 : vector<8x256xf32>
    %c2 = arith.constant 2 : index
    %c0_7 = arith.constant 0 : index
    %c0_8 = arith.constant 0 : index
    %8 = vector.load %arg1[%c2, %c0_7, %c0_8] : memref<4x75x256xbf16, #tpu.memory_space<vmem>>, vector<1x75x256xbf16>
    %9 = vector.shape_cast %8 : vector<1x75x256xbf16> to vector<75x256xbf16>
    %cst_9 = arith.constant dense<0.000000e+00> : vector<8x256xf32>
    %10 = tpu.matmul %0, %9, %cst_9 {dimension_numbers = #tpu.dot_dimension_numbers<[1], [0], [0], [1], [0, 0, 1, 1], [], []>} : vector<8x75xbf16>, vector<75x256xbf16>, vector<8x256xf32> -> vector<8x256xf32>
    %11 = arith.maximumf %7, %10 : vector<8x256xf32>
    %c3 = arith.constant 3 : index
    %c0_10 = arith.constant 0 : index
    %c0_11 = arith.constant 0 : index
    %12 = vector.load %arg1[%c3, %c0_10, %c0_11] : memref<4x75x256xbf16, #tpu.memory_space<vmem>>, vector<1x75x256xbf16>
    %13 = vector.shape_cast %12 : vector<1x75x256xbf16> to vector<75x256xbf16>
    %cst_12 = arith.constant dense<0.000000e+00> : vector<8x256xf32>
    %14 = tpu.matmul %0, %13, %cst_12 {dimension_numbers = #tpu.dot_dimension_numbers<[1], [0], [0], [1], [0, 0, 1, 1], [], []>} : vector<8x75xbf16>, vector<75x256xbf16>, vector<8x256xf32> -> vector<8x256xf32>
    %15 = arith.maximumf %11, %14 : vector<8x256xf32>
    %c0_13 = arith.constant 0 : index
    %c0_14 = arith.constant 0 : index
    %16 = vector.load %arg3[%c0_13, %c0_14] : memref<8x1xf32, #tpu.memory_space<vmem>>, vector<8x1xf32>
    %17 = vector.broadcast %16 : vector<8x1xf32> to vector<8x256xf32>
    %18 = arith.addf %15, %17 : vector<8x256xf32>
    %cst_15 = arith.constant 0.000000e+00 : f32
    %19 = vector.broadcast %cst_15 : f32 to vector<8x256xf32>
    %20 = arith.maximumf %18, %19 : vector<8x256xf32>
    %21 = arith.truncf %20 : vector<8x256xf32> to vector<8x256xbf16>
    %c0_16 = arith.constant 0 : index
    %c0_17 = arith.constant 0 : index
    %22 = vector.load %arg4[%c0_16, %c0_17] : memref<8x256xbf16, #tpu.memory_space<vmem>>, vector<8x256xbf16>
    tpu.vector_store %arg4[%c0_16, %c0_17], %21 {strides = array<i32>} : memref<8x256xbf16, #tpu.memory_space<vmem>>, vector<8x256xbf16>,
    return
  }
  func.func @transform_0(%arg0: i32) -> (i32, i32, i32) {
    %c0_i32 = arith.constant 0 : i32
    %c0_i32_0 = arith.constant 0 : i32
    %c0_i32_1 = arith.constant 0 : i32
    return %c0_i32, %c0_i32_0, %arg0 : i32, i32, i32
  }
  func.func @transform_1(%arg0: i32) -> (i32, i32) {
    %c0_i32 = arith.constant 0 : i32
    %c0_i32_0 = arith.constant 0 : i32
    %c0_i32_1 = arith.constant 0 : i32
    return %c0_i32, %c0_i32_0 : i32, i32
  }
  func.func @transform_2(%arg0: i32) -> (i32, i32) {
    %c0_i32 = arith.constant 0 : i32
    %c0_i32_0 = arith.constant 0 : i32
    %c0_i32_1 = arith.constant 0 : i32
    return %c0_i32, %c0_i32_0 : i32, i32
  }
  func.func @transform_3(%arg0: i32) -> (i32, i32) {
    %c0_i32 = arith.constant 0 : i32
    %c0_i32_0 = arith.constant 0 : i32
    return %c0_i32, %arg0 : i32, i32
  }
}

module attributes {stable_mosaic.version = 11 : i64} {
  func.func @_conv_pool_kernel(%arg0: i32, %arg1: memref<4x200x50xbf16, #tpu.memory_space<vmem>>, %arg2: memref<16x200xbf16, #tpu.memory_space<vmem>>, %arg3: memref<16x1xf32, #tpu.memory_space<vmem>>, %arg4: memref<16x50xf32, #tpu.memory_space<vmem>>) attributes {dimension_semantics = [#tpu.dimension_semantics<parallel>], iteration_bounds = array<i64: 1>, scalar_prefetch = 0 : i64, scratch_operands = 0 : i64, tpu.core_type = #tpu.core_type<tc>, window_params = [{transform_indices = @transform_0, window_bounds = array<i64: 4, 200, 50>}, {pipeline_mode = #tpu.pipeline_mode<synchronous>, transform_indices = @transform_1, window_bounds = array<i64: 16, 200>}, {pipeline_mode = #tpu.pipeline_mode<synchronous>, transform_indices = @transform_2, window_bounds = array<i64: 16, 1>}, {transform_indices = @transform_3, window_bounds = array<i64: 16, 50>}]} {
    %c0 = arith.constant 0 : index
    %c0_0 = arith.constant 0 : index
    %0 = vector.load %arg2[%c0, %c0_0] : memref<16x200xbf16, #tpu.memory_space<vmem>>, vector<16x200xbf16>
    %c0_1 = arith.constant 0 : index
    %c0_2 = arith.constant 0 : index
    %c0_3 = arith.constant 0 : index
    %1 = vector.load %arg1[%c0_1, %c0_2, %c0_3] : memref<4x200x50xbf16, #tpu.memory_space<vmem>>, vector<1x200x50xbf16>
    %2 = vector.shape_cast %1 : vector<1x200x50xbf16> to vector<200x50xbf16>
    %cst = arith.constant dense<0.000000e+00> : vector<16x50xf32>
    %3 = tpu.matmul %0, %2, %cst {dimension_numbers = #tpu.dot_dimension_numbers<[1], [0], [0], [1], [0, 0, 1, 1], [], []>} : vector<16x200xbf16>, vector<200x50xbf16>, vector<16x50xf32> -> vector<16x50xf32>
    %c1 = arith.constant 1 : index
    %c0_4 = arith.constant 0 : index
    %c0_5 = arith.constant 0 : index
    %4 = vector.load %arg1[%c1, %c0_4, %c0_5] : memref<4x200x50xbf16, #tpu.memory_space<vmem>>, vector<1x200x50xbf16>
    %5 = vector.shape_cast %4 : vector<1x200x50xbf16> to vector<200x50xbf16>
    %cst_6 = arith.constant dense<0.000000e+00> : vector<16x50xf32>
    %6 = tpu.matmul %0, %5, %cst_6 {dimension_numbers = #tpu.dot_dimension_numbers<[1], [0], [0], [1], [0, 0, 1, 1], [], []>} : vector<16x200xbf16>, vector<200x50xbf16>, vector<16x50xf32> -> vector<16x50xf32>
    %7 = arith.maximumf %3, %6 : vector<16x50xf32>
    %c2 = arith.constant 2 : index
    %c0_7 = arith.constant 0 : index
    %c0_8 = arith.constant 0 : index
    %8 = vector.load %arg1[%c2, %c0_7, %c0_8] : memref<4x200x50xbf16, #tpu.memory_space<vmem>>, vector<1x200x50xbf16>
    %9 = vector.shape_cast %8 : vector<1x200x50xbf16> to vector<200x50xbf16>
    %cst_9 = arith.constant dense<0.000000e+00> : vector<16x50xf32>
    %10 = tpu.matmul %0, %9, %cst_9 {dimension_numbers = #tpu.dot_dimension_numbers<[1], [0], [0], [1], [0, 0, 1, 1], [], []>} : vector<16x200xbf16>, vector<200x50xbf16>, vector<16x50xf32> -> vector<16x50xf32>
    %11 = arith.maximumf %7, %10 : vector<16x50xf32>
    %c3 = arith.constant 3 : index
    %c0_10 = arith.constant 0 : index
    %c0_11 = arith.constant 0 : index
    %12 = vector.load %arg1[%c3, %c0_10, %c0_11] : memref<4x200x50xbf16, #tpu.memory_space<vmem>>, vector<1x200x50xbf16>
    %13 = vector.shape_cast %12 : vector<1x200x50xbf16> to vector<200x50xbf16>
    %cst_12 = arith.constant dense<0.000000e+00> : vector<16x50xf32>
    %14 = tpu.matmul %0, %13, %cst_12 {dimension_numbers = #tpu.dot_dimension_numbers<[1], [0], [0], [1], [0, 0, 1, 1], [], []>} : vector<16x200xbf16>, vector<200x50xbf16>, vector<16x50xf32> -> vector<16x50xf32>
    %15 = arith.maximumf %11, %14 : vector<16x50xf32>
    %c0_13 = arith.constant 0 : index
    %c0_14 = arith.constant 0 : index
    %16 = vector.load %arg3[%c0_13, %c0_14] : memref<16x1xf32, #tpu.memory_space<vmem>>, vector<16x1xf32>
    %17 = vector.broadcast %16 : vector<16x1xf32> to vector<16x50xf32>
    %18 = arith.addf %15, %17 : vector<16x50xf32>
    %cst_15 = arith.constant 0.000000e+00 : f32
    %19 = vector.broadcast %cst_15 : f32 to vector<16x50xf32>
    %20 = arith.maximumf %18, %19 : vector<16x50xf32>
    %c0_16 = arith.constant 0 : index
    %c0_17 = arith.constant 0 : index
    %21 = vector.load %arg4[%c0_16, %c0_17] : memref<16x50xf32, #tpu.memory_space<vmem>>, vector<16x50xf32>
    tpu.vector_store %arg4[%c0_16, %c0_17], %20 {strides = array<i32>} : memref<16x50xf32, #tpu.memory_space<vmem>>, vector<16x50xf32>,
    return
  }
  func.func @transform_0(%arg0: i32) -> (i32, i32, i32) {
    %c0_i32 = arith.constant 0 : i32
    %c0_i32_0 = arith.constant 0 : i32
    %c0_i32_1 = arith.constant 0 : i32
    return %c0_i32, %c0_i32_0, %arg0 : i32, i32, i32
  }
  func.func @transform_1(%arg0: i32) -> (i32, i32) {
    %c0_i32 = arith.constant 0 : i32
    %c0_i32_0 = arith.constant 0 : i32
    %c0_i32_1 = arith.constant 0 : i32
    return %c0_i32, %c0_i32_0 : i32, i32
  }
  func.func @transform_2(%arg0: i32) -> (i32, i32) {
    %c0_i32 = arith.constant 0 : i32
    %c0_i32_0 = arith.constant 0 : i32
    %c0_i32_1 = arith.constant 0 : i32
    return %c0_i32, %c0_i32_0 : i32, i32
  }
  func.func @transform_3(%arg0: i32) -> (i32, i32) {
    %c0_i32 = arith.constant 0 : i32
    %c0_i32_0 = arith.constant 0 : i32
    return %c0_i32, %arg0 : i32, i32
  }
}

module attributes {stable_mosaic.version = 11 : i64} {
  func.func @_mlp_head_kernel(%arg0: i32, %arg1: memref<2x400xf32, #tpu.memory_space<vmem>>, %arg2: memref<400x128xf32, #tpu.memory_space<vmem>>, %arg3: memref<1x128xf32, #tpu.memory_space<vmem>>, %arg4: memref<128x128xf32, #tpu.memory_space<vmem>>, %arg5: memref<1x128xf32, #tpu.memory_space<vmem>>, %arg6: memref<128x128xf32, #tpu.memory_space<vmem>>, %arg7: memref<1x128xf32, #tpu.memory_space<vmem>>, %arg8: memref<2x128xf32, #tpu.memory_space<vmem>>, %arg9: memref<2x128xf32, #tpu.memory_space<vmem>>) attributes {dimension_semantics = [#tpu.dimension_semantics<parallel>], iteration_bounds = array<i64: 1>, scalar_prefetch = 0 : i64, scratch_operands = 0 : i64, tpu.core_type = #tpu.core_type<tc>, window_params = [{transform_indices = @transform_0, window_bounds = array<i64: 2, 400>}, {pipeline_mode = #tpu.pipeline_mode<synchronous>, transform_indices = @transform_1, window_bounds = array<i64: 400, 128>}, {pipeline_mode = #tpu.pipeline_mode<synchronous>, transform_indices = @transform_2, window_bounds = array<i64: 1, 128>}, {pipeline_mode = #tpu.pipeline_mode<synchronous>, transform_indices = @transform_3, window_bounds = array<i64: 128, 128>}, {pipeline_mode = #tpu.pipeline_mode<synchronous>, transform_indices = @transform_4, window_bounds = array<i64: 1, 128>}, {pipeline_mode = #tpu.pipeline_mode<synchronous>, transform_indices = @transform_5, window_bounds = array<i64: 128, 128>}, {pipeline_mode = #tpu.pipeline_mode<synchronous>, transform_indices = @transform_6, window_bounds = array<i64: 1, 128>}, {transform_indices = @transform_7, window_bounds = array<i64: 2, 128>}, {transform_indices = @transform_8, window_bounds = array<i64: 2, 128>}]} {
    %c0 = arith.constant 0 : index
    %c0_0 = arith.constant 0 : index
    %0 = vector.load %arg1[%c0, %c0_0] : memref<2x400xf32, #tpu.memory_space<vmem>>, vector<2x400xf32>
    %c0_1 = arith.constant 0 : index
    %c0_2 = arith.constant 0 : index
    %1 = vector.load %arg2[%c0_1, %c0_2] : memref<400x128xf32, #tpu.memory_space<vmem>>, vector<400x128xf32>
    %cst = arith.constant dense<0.000000e+00> : vector<2x128xf32>
    %2 = tpu.matmul %0, %1, %cst {dimension_numbers = #tpu.dot_dimension_numbers<[1], [0], [0], [1], [0, 0, 1, 1], [], []>} : vector<2x400xf32>, vector<400x128xf32>, vector<2x128xf32> -> vector<2x128xf32>
    %c0_3 = arith.constant 0 : index
    %c0_4 = arith.constant 0 : index
    %3 = vector.load %arg3[%c0_3, %c0_4] : memref<1x128xf32, #tpu.memory_space<vmem>>, vector<1x128xf32>
    %4 = vector.broadcast %3 : vector<1x128xf32> to vector<2x128xf32>
    %5 = arith.addf %2, %4 : vector<2x128xf32>
    %cst_5 = arith.constant 0.000000e+00 : f32
    %6 = vector.broadcast %cst_5 : f32 to vector<2x128xf32>
    %7 = arith.maximumf %5, %6 : vector<2x128xf32>
    %c0_6 = arith.constant 0 : index
    %c0_7 = arith.constant 0 : index
    %8 = vector.load %arg4[%c0_6, %c0_7] : memref<128x128xf32, #tpu.memory_space<vmem>>, vector<128x128xf32>
    %cst_8 = arith.constant dense<0.000000e+00> : vector<2x128xf32>
    %9 = tpu.matmul %7, %8, %cst_8 {dimension_numbers = #tpu.dot_dimension_numbers<[1], [0], [0], [1], [0, 0, 1, 1], [], []>} : vector<2x128xf32>, vector<128x128xf32>, vector<2x128xf32> -> vector<2x128xf32>
    %c0_9 = arith.constant 0 : index
    %c0_10 = arith.constant 0 : index
    %10 = vector.load %arg5[%c0_9, %c0_10] : memref<1x128xf32, #tpu.memory_space<vmem>>, vector<1x128xf32>
    %11 = vector.broadcast %10 : vector<1x128xf32> to vector<2x128xf32>
    %12 = arith.addf %9, %11 : vector<2x128xf32>
    %cst_11 = arith.constant 0.000000e+00 : f32
    %13 = vector.broadcast %cst_11 : f32 to vector<2x128xf32>
    %14 = arith.maximumf %12, %13 : vector<2x128xf32>
    %c0_12 = arith.constant 0 : index
    %c0_13 = arith.constant 0 : index
    %15 = vector.load %arg6[%c0_12, %c0_13] : memref<128x128xf32, #tpu.memory_space<vmem>>, vector<128x128xf32>
    %cst_14 = arith.constant dense<0.000000e+00> : vector<2x128xf32>
    %16 = tpu.matmul %14, %15, %cst_14 {dimension_numbers = #tpu.dot_dimension_numbers<[1], [0], [0], [1], [0, 0, 1, 1], [], []>} : vector<2x128xf32>, vector<128x128xf32>, vector<2x128xf32> -> vector<2x128xf32>
    %c0_15 = arith.constant 0 : index
    %c0_16 = arith.constant 0 : index
    %17 = vector.load %arg7[%c0_15, %c0_16] : memref<1x128xf32, #tpu.memory_space<vmem>>, vector<1x128xf32>
    %18 = vector.broadcast %17 : vector<1x128xf32> to vector<2x128xf32>
    %19 = arith.addf %16, %18 : vector<2x128xf32>
    %c0_17 = arith.constant 0 : index
    %c0_18 = arith.constant 0 : index
    %20 = vector.load %arg8[%c0_17, %c0_18] : memref<2x128xf32, #tpu.memory_space<vmem>>, vector<2x128xf32>
    tpu.vector_store %arg8[%c0_17, %c0_18], %14 {strides = array<i32>} : memref<2x128xf32, #tpu.memory_space<vmem>>, vector<2x128xf32>,
    %c0_19 = arith.constant 0 : index
    %c0_20 = arith.constant 0 : index
    %21 = vector.load %arg9[%c0_19, %c0_20] : memref<2x128xf32, #tpu.memory_space<vmem>>, vector<2x128xf32>
    tpu.vector_store %arg9[%c0_19, %c0_20], %19 {strides = array<i32>} : memref<2x128xf32, #tpu.memory_space<vmem>>, vector<2x128xf32>,
    return
  }
  func.func @transform_0(%arg0: i32) -> (i32, i32) {
    %c0_i32 = arith.constant 0 : i32
    %c0_i32_0 = arith.constant 0 : i32
    return %arg0, %c0_i32 : i32, i32
  }
  func.func @transform_1(%arg0: i32) -> (i32, i32) {
    %c0_i32 = arith.constant 0 : i32
    %c0_i32_0 = arith.constant 0 : i32
    %c0_i32_1 = arith.constant 0 : i32
    return %c0_i32, %c0_i32_0 : i32, i32
  }
  func.func @transform_2(%arg0: i32) -> (i32, i32) {
    %c0_i32 = arith.constant 0 : i32
    %c0_i32_0 = arith.constant 0 : i32
    %c0_i32_1 = arith.constant 0 : i32
    return %c0_i32, %c0_i32_0 : i32, i32
  }
  func.func @transform_3(%arg0: i32) -> (i32, i32) {
    %c0_i32 = arith.constant 0 : i32
    %c0_i32_0 = arith.constant 0 : i32
    %c0_i32_1 = arith.constant 0 : i32
    return %c0_i32, %c0_i32_0 : i32, i32
  }
  func.func @transform_4(%arg0: i32) -> (i32, i32) {
    %c0_i32 = arith.constant 0 : i32
    %c0_i32_0 = arith.constant 0 : i32
    %c0_i32_1 = arith.constant 0 : i32
    return %c0_i32, %c0_i32_0 : i32, i32
  }
  func.func @transform_5(%arg0: i32) -> (i32, i32) {
    %c0_i32 = arith.constant 0 : i32
    %c0_i32_0 = arith.constant 0 : i32
    %c0_i32_1 = arith.constant 0 : i32
    return %c0_i32, %c0_i32_0 : i32, i32
  }
  func.func @transform_6(%arg0: i32) -> (i32, i32) {
    %c0_i32 = arith.constant 0 : i32
    %c0_i32_0 = arith.constant 0 : i32
    %c0_i32_1 = arith.constant 0 : i32
    return %c0_i32, %c0_i32_0 : i32, i32
  }
  func.func @transform_7(%arg0: i32) -> (i32, i32) {
    %c0_i32 = arith.constant 0 : i32
    %c0_i32_0 = arith.constant 0 : i32
    return %arg0, %c0_i32 : i32, i32
  }
  func.func @transform_8(%arg0: i32) -> (i32, i32) {
    %c0_i32 = arith.constant 0 : i32
    %c0_i32_0 = arith.constant 0 : i32
    return %arg0, %c0_i32 : i32, i32
  }
}

</mosaic_0001>

<llo_original>
// kernel: cnn_cifar_forward.3
$region0: #{cnn_cifar_forward.3}
  #allocation0 [shape = 'u32[]', space=smem, size = 0x4, offset = 0x4, fixed_abs, tag = 'smem constant byte address 0x4 - core index']
  #allocation1 [shape = 'u32[144,128]{1,0:T(1,128)}', space=vmem, size = 0x12000, scoped, tag = 'internal scratch']
  %s0 = inlined_call_operand.vmem [shape: bf16[4,75,392], index: 0, kind: input, shape index: {}]
  %s1 = inlined_call_operand.vmem [shape: bf16[8,75], index: 1, kind: input, shape index: {}]
  %s2 = inlined_call_operand.vmem [shape: f32[8,1], index: 2, kind: input, shape index: {}]
  %s3 = inlined_call_operand.vmem [shape: bf16[8,392], index: 3, kind: output, shape index: {}]
  %s4 = sld [smem:[#allocation0]]
  $region83: #{cnn_cifar_forward.3} parent=0
    _
  %s6 = ssub.s32 1, %s4
  %s7 = scalar_select 0, %s6, %s4
  $region1: #{cnn_cifar_forward.3} parent=0
    #allocation2 [shape = 'u8[327680]{0}', space=vmem, size = 0x50000, scoped, tag = 'input window, operand 0']
    loop: start=0, step=1, limit=4
    $region2: #{cnn_cifar_forward.3} parent=1 // loop_pre_header
      _
    $region3: #{cnn_cifar_forward.3} parent=1 // loop_header
      %s9 = sphi 0, %s13
      %p10 = scmp.ge.s32.totalorder %s9, 4
      %s19 = sphi 0, %s21
      %s22 = sphi 0, %s19
      %s23 = sphi 0, %s22
      %s39 = sphi 0, %s23
      %s43 = sphi 0, %s43
      %s45 = sphi 0, %s43
      %s46 = sphi 0, %s45
      %s60 = sphi 0, %s46
      %s64 = sphi 0, %s64
      %s66 = sphi 0, %s64
      %s67 = sphi 0, %s66
      %s81 = sphi 0, %s67
      %s87 = sphi 0, %s89
      %s90 = sphi 0, %s87
      %s91 = sphi 0, %s90
      %s107 = sphi 0, %s91
    $region4: #{cnn_cifar_forward.3} parent=1 // loop_header_branch
      %12 = sbr.rel (%p10) target = $region8
    $region5: #{cnn_cifar_forward.3} parent=1 // loop_body
      %s14 = ssub.s32 %s9, 1
      %s15 = ssub.s32 %s9, 2
      %s16 = sadd.s32 %s9, 1
      %s17 = ssub.s32 %s9, %s16
      %p18 = scmp.eq.s32.totalorder %s17, 0
      %s20 = sadd.s32 %s19, 1
      %s21 = scalar_select %p18, %s19, %s20
      %p24 = pneg %p18
      %p25 = scmp.eq.s32.totalorder %s9, 1
      %p26 = por %p24, %p25
      %p27 = scmp.ne.s32.totalorder %s19, %s22
      %p28 = scmp.eq.s32.totalorder %s9, 0
      %p29 = por %p27, %p28
      %p30 = scmp.ne.s32.totalorder %s19, %s22
      %p31 = scmp.eq.s32.totalorder %s14, 1
      %p32 = por %p30, %p31
      %p33 = scmp.ne.s32.totalorder %s22, %s23
      %p34 = scmp.eq.s32.totalorder %s14, 0
      %p35 = por %p33, %p34
      %p36 = scmp.ne.s32.totalorder %s22, %s23
      %p37 = scmp.eq.s32.totalorder %s15, 1
      %p38 = por %p36, %p37
      %p40 = scmp.ne.s32.totalorder %s23, %s39
      %p41 = scmp.eq.s32.totalorder %s15, 0
      %p42 = por %p40, %p41
      %s44 = sadd.s32 %s43, 1
      %p47 = scmp.eq.s32.totalorder %s9, 1
      %p48 = scmp.ne.s32.totalorder %s43, %s45
      %p49 = scmp.eq.s32.totalorder %s9, 0
      %p50 = por %p48, %p49
      %p51 = scmp.ne.s32.totalorder %s43, %s45
      %p52 = scmp.eq.s32.totalorder %s14, 1
      %p53 = por %p51, %p52
      %p54 = scmp.ne.s32.totalorder %s45, %s46
      %p55 = scmp.eq.s32.totalorder %s14, 0
      %p56 = por %p54, %p55
      %p57 = scmp.ne.s32.totalorder %s45, %s46
      %p58 = scmp.eq.s32.totalorder %s15, 1
      %p59 = por %p57, %p58
      %p61 = scmp.ne.s32.totalorder %s46, %s60
      %p62 = scmp.eq.s32.totalorder %s15, 0
      %p63 = por %p61, %p62
      %s65 = sadd.s32 %s64, 1
      %p68 = scmp.eq.s32.totalorder %s9, 1
      %p69 = scmp.ne.s32.totalorder %s64, %s66
      %p70 = scmp.eq.s32.totalorder %s9, 0
      %p71 = por %p69, %p70
      %p72 = scmp.ne.s32.totalorder %s64, %s66
      %p73 = scmp.eq.s32.totalorder %s14, 1
      %p74 = por %p72, %p73
      %p75 = scmp.ne.s32.totalorder %s66, %s67
      %p76 = scmp.eq.s32.totalorder %s14, 0
      %p77 = por %p75, %p76
      %p78 = scmp.ne.s32.totalorder %s66, %s67
      %p79 = scmp.eq.s32.totalorder %s15, 1
      %p80 = por %p78, %p79
      %p82 = scmp.ne.s32.totalorder %s67, %s81
      %p83 = scmp.eq.s32.totalorder %s15, 0
      %p84 = por %p82, %p83
      %s85 = ssub.s32 %s9, %s16
      %p86 = scmp.eq.s32.totalorder %s85, 0
      %s88 = sadd.s32 %s87, 1
      %s89 = scalar_select %p86, %s87, %s88
      %p92 = pneg %p86
      %p93 = scmp.eq.s32.totalorder %s9, 1
      %p94 = por %p92, %p93
      %p95 = scmp.ne.s32.totalorder %s87, %s90
      %p96 = scmp.eq.s32.totalorder %s9, 0
      %p97 = por %p95, %p96
      %p98 = scmp.ne.s32.totalorder %s87, %s90
      %p99 = scmp.eq.s32.totalorder %s14, 1
      %p100 = por %p98, %p99
      %p101 = scmp.ne.s32.totalorder %s90, %s91
      %p102 = scmp.eq.s32.totalorder %s14, 0
      %p103 = por %p101, %p102
      %p104 = scmp.ne.s32.totalorder %s90, %s91
      %p105 = scmp.eq.s32.totalorder %s15, 1
      %p106 = por %p104, %p105
      %p108 = scmp.ne.s32.totalorder %s91, %s107
      %p109 = scmp.eq.s32.totalorder %s15, 0
      %p110 = por %p108, %p109
      %p111 = scmp.le.s32.totalorder 1, %s9
      %p112 = scmp.lt.s32.totalorder %s9, 3
      %p113 = pnand %p111, %p112
      %p114 = pneg %p113
      // Predicated region
      $region9: #{cnn_cifar_forward.3} parent=5 // pred_check
        _
      $region10: #{cnn_cifar_forward.3} parent=5 // pred_check_branch
        %116 = sbr.rel (%p113) target = $region12
      $region11: #{cnn_cifar_forward.3} parent=5 // pred_region
        %s117 = ssub.s32 %s9, 1
        // Predicated region
        $region13: #{cnn_cifar_forward.3} parent=11 // pred_check
          %p118 = pneg %p56
        $region14: #{cnn_cifar_forward.3} parent=11 // pred_check_branch
          %120 = sbr.rel (%p118) target = $region16
        $region15: #{cnn_cifar_forward.3} parent=11 // pred_region
          _
        $region16: #{cnn_cifar_forward.3} parent=11 // pred_fallthru
          _
        // Predicated region
        $region17: #{cnn_cifar_forward.3} parent=11 // pred_check
          %p121 = pneg %p77
        $region18: #{cnn_cifar_forward.3} parent=11 // pred_check_branch
          %123 = sbr.rel (%p121) target = $region20
        $region19: #{cnn_cifar_forward.3} parent=11 // pred_region
          _
        $region20: #{cnn_cifar_forward.3} parent=11 // pred_fallthru
          _
      $region12: #{cnn_cifar_forward.3} parent=5 // pred_fallthru
        _
      %p124 = scmp.lt.s32.totalorder %s9, 2
      // Predicated region
      $region21: #{cnn_cifar_forward.3} parent=5 // pred_check
        %p125 = pneg %p124
      $region22: #{cnn_cifar_forward.3} parent=5 // pred_check_branch
        %127 = sbr.rel (%p125) target = $region24
      $region23: #{cnn_cifar_forward.3} parent=5 // pred_region
        // Predicated region
        $region25: #{cnn_cifar_forward.3} parent=23 // pred_check
          %p128 = pneg %p29
        $region26: #{cnn_cifar_forward.3} parent=23 // pred_check_branch
          %130 = sbr.rel (%p128) target = $region28
        $region27: #{cnn_cifar_forward.3} parent=23 // pred_region
          %s131 = sand.u32 %s19, 1
          %s132 = sand.u32 %s19, 1
          %s133 = smul.addr %s132, 320
          %s134 = scalar_lea.vmem [#allocation2], %s133
          %s135 = smul.u32 2, %s9
          %s136 = smul.addr %s135, 4
          %s137 = scalar_lea.vmem %s0, %s136
          // Predicated region
          $region29: #{cnn_cifar_forward.3} parent=27 // pred_check
            _
          $region30: #{cnn_cifar_forward.3} parent=27 // pred_check_branch
            %139 = sbr.rel (0) target = $region32
          $region31: #{cnn_cifar_forward.3} parent=27 // pred_region
            // Predicated region
            $region33: #{cnn_cifar_forward.3} parent=31 // pred_check
              _
            $region34: #{cnn_cifar_forward.3} parent=31 // pred_check_branch
              %141 = sbr.rel (0) target = $region36
            $region35: #{cnn_cifar_forward.3} parent=31 // pred_region
              // Predicated region
              $region48: #{cnn_cifar_forward.3} parent=35 // pred_check
                _
              $region49: #{cnn_cifar_forward.3} parent=35 // pred_check_branch
                %234 = sbr.rel (0) target = $region51
              $region50: #{cnn_cifar_forward.3} parent=35 // pred_region
                loop: start=0, step=1, limit=1
                $region52: #{cnn_cifar_forward.3} parent=50 // loop_pre_header
                  _
                $region53: #{cnn_cifar_forward.3} parent=50 // loop_header
                  %s236 = sphi 0, %s240
                  %p237 = scmp.ge.s32.totalorder %s236, 1
                  %s241 = sphi %s137, %s137
                  %s242 = sphi %s134, %s134
                $region54: #{cnn_cifar_forward.3} parent=50 // loop_header_branch
                  %239 = sbr.rel (%p237) target = $region58
                $region55: #{cnn_cifar_forward.3} parent=50 // loop_body
                  %v243 = vld [vmem:[%s241] sm:$0xff]
                  %244 = vst [vmem:[%s242] sm:$0xff] %v243
                  %v245 = vld [vmem:[%s241 + $0x10] sm:$0xff]
                  %246 = vst [vmem:[%s242 + $0x8] sm:$0xff] %v245
                  %v247 = vld [vmem:[%s241 + $0x20] sm:$0xff]
                  %248 = vst [vmem:[%s242 + $0x10] sm:$0xff] %v247
                  %v249 = vld [vmem:[%s241 + $0x30] sm:$0xff]
                  %250 = vst [vmem:[%s242 + $0x18] sm:$0xff] %v249
                  %v251 = vld [vmem:[%s241 + $0x40] sm:$0xff]
                  %252 = vst [vmem:[%s242 + $0x20] sm:$0xff] %v251
                  %v253 = vld [vmem:[%s241 + $0x50] sm:$0xff]
                  %254 = vst [vmem:[%s242 + $0x28] sm:$0xff] %v253
                  %v255 = vld [vmem:[%s241 + $0x60] sm:$0xff]
                  %256 = vst [vmem:[%s242 + $0x30] sm:$0xff] %v255
                  %v257 = vld [vmem:[%s241 + $0x70] sm:$0xff]
                  %258 = vst [vmem:[%s242 + $0x38] sm:$0xff] %v257
                  %v259 = vld [vmem:[%s241 + $0x80] sm:$0xff]
                  %260 = vst [vmem:[%s242 + $0x40] sm:$0xff] %v259
                  %v261 = vld [vmem:[%s241 + $0x90] sm:$0xff]
                  %262 = vst [vmem:[%s242 + $0x48] sm:$0xff] %v261
                  %v263 = vld [vmem:[%s241 + $0xa0] sm:$0xff]
                  %264 = vst [vmem:[%s242 + $0x50] sm:$0xff] %v263
                  %v265 = vld [vmem:[%s241 + $0xb0] sm:$0xff]
                  %266 = vst [vmem:[%s242 + $0x58] sm:$0xff] %v265
                  %v267 = vld [vmem:[%s241 + $0xc0] sm:$0xff]
                  %268 = vst [vmem:[%s242 + $0x60] sm:$0xff] %v267
                  %v269 = vld [vmem:[%s241 + $0xd0] sm:$0xff]
                  %270 = vst [vmem:[%s242 + $0x68] sm:$0xff] %v269
                  %v271 = vld [vmem:[%s241 + $0xe0] sm:$0xff]
                  %272 = vst [vmem:[%s242 + $0x70] sm:$0xff] %v271
                  %v273 = vld [vmem:[%s241 + $0xf0] sm:$0xff]
                  %274 = vst [vmem:[%s242 + $0x78] sm:$0xff] %v273
                  %v275 = vld [vmem:[%s241 + $0x100] sm:$0xff]
                  %276 = vst [vmem:[%s242 + $0x80] sm:$0xff] %v275
                  %v277 = vld [vmem:[%s241 + $0x110] sm:$0xff]
                  %278 = vst [vmem:[%s242 + $0x88] sm:$0xff] %v277
                  %v279 = vld [vmem:[%s241 + $0x120] sm:$0xff]
                  %280 = vst [vmem:[%s242 + $0x90] sm:$0xff] %v279
                  %v281 = vld [vmem:[%s241 + $0x130] sm:$0xff]
                  %282 = vst [vmem:[%s242 + $0x98] sm:$0xff] %v281
                  %v283 = vld [vmem:[%s241 + $0x140] sm:$0xff]
                  %284 = vst [vmem:[%s242 + $0xa0] sm:$0xff] %v283
                  %v285 = vld [vmem:[%s241 + $0x150] sm:$0xff]
                  %286 = vst [vmem:[%s242 + $0xa8] sm:$0xff] %v285
                  %v287 = vld [vmem:[%s241 + $0x160] sm:$0xff]
                  %288 = vst [vmem:[%s242 + $0xb0] sm:$0xff] %v287
                  %v289 = vld [vmem:[%s241 + $0x170] sm:$0xff]
                  %290 = vst [vmem:[%s242 + $0xb8] sm:$0xff] %v289
                  %v291 = vld [vmem:[%s241 + $0x180] sm:$0xff]
                  %292 = vst [vmem:[%s242 + $0xc0] sm:$0xff] %v291
                  %v293 = vld [vmem:[%s241 + $0x190] sm:$0xff]
                  %294 = vst [vmem:[%s242 + $0xc8] sm:$0xff] %v293
                  %v295 = vld [vmem:[%s241 + $0x1a0] sm:$0xff]
                  %296 = vst [vmem:[%s242 + $0xd0] sm:$0xff] %v295
                  %v297 = vld [vmem:[%s241 + $0x1b0] sm:$0xff]
                  %298 = vst [vmem:[%s242 + $0xd8] sm:$0xff] %v297
                  %v299 = vld [vmem:[%s241 + $0x1c0] sm:$0xff]
                  %300 = vst [vmem:[%s242 + $0xe0] sm:$0xff] %v299
                  %v301 = vld [vmem:[%s241 + $0x1d0] sm:$0xff]
                  %302 = vst [vmem:[%s242 + $0xe8] sm:$0xff] %v301
                  %v303 = vld [vmem:[%s241 + $0x1e0] sm:$0xff]
                  %304 = vst [vmem:[%s242 + $0xf0] sm:$0xff] %v303
                  %v305 = vld [vmem:[%s241 + $0x1f0] sm:$0xff]
                  %306 = vst [vmem:[%s242 + $0xf8] sm:$0xff] %v305
                  %v307 = vld [vmem:[%s241 + $0x200] sm:$0xff]
                  %308 = vst [vmem:[%s242 + $0x100] sm:$0xff] %v307
                  %v309 = vld [vmem:[%s241 + $0x210] sm:$0xff]
                  %310 = vst [vmem:[%s242 + $0x108] sm:$0xff] %v309
                  %v311 = vld [vmem:[%s241 + $0x220] sm:$0xff]
                  %312 = vst [vmem:[%s242 + $0x110] sm:$0xff] %v311
                  %v313 = vld [vmem:[%s241 + $0x230] sm:$0xff]
                  %314 = vst [vmem:[%s242 + $0x118] sm:$0xff] %v313
                  %v315 = vld [vmem:[%s241 + $0x240] sm:$0xff]
                  %316 = vst [vmem:[%s242 + $0x120] sm:$0xff] %v315
                  %v317 = vld [vmem:[%s241 + $0x250] sm:$0xff]
                  %318 = vst [vmem:[%s242 + $0x128] sm:$0xff] %v317
                  %v319 = vld [vmem:[%s241 + $0x260] sm:$0xff]
                  %320 = vst [vmem:[%s242 + $0x130] sm:$0xff] %v319
                  %v321 = vld [vmem:[%s241 + $0x270] sm:$0xff]
                  %322 = vst [vmem:[%s242 + $0x138] sm:$0xff] %v321
                $region56: #{cnn_cifar_forward.3} parent=50 // loop_footer
                  %s240 = sadd.s32 1, %s236
                $region57: #{cnn_cifar_forward.3} parent=50 // loop_footer_branch
                  %235 = sbr.rel target = $region53
                $region58: #{cnn_cifar_forward.3} parent=50 // loop_exit
                  _
              $region51: #{cnn_cifar_forward.3} parent=35 // pred_fallthru
                _
              // Predicated region
              $region59: #{cnn_cifar_forward.3} parent=35 // pred_check
                _
              $region60: #{cnn_cifar_forward.3} parent=35 // pred_check_branch
                %324 = sbr.rel target = $region62
              $region61: #{cnn_cifar_forward.3} parent=35 // pred_region
                _
              $region62: #{cnn_cifar_forward.3} parent=35 // pred_fallthru
                _
            $region36: #{cnn_cifar_forward.3} parent=31 // pred_fallthru
              _
            // Predicated region
            $region37: #{cnn_cifar_forward.3} parent=31 // pred_check
              _
            $region38: #{cnn_cifar_forward.3} parent=31 // pred_check_branch
              %143 = sbr.rel target = $region40
            $region39: #{cnn_cifar_forward.3} parent=31 // pred_region
              loop: start=0, step=1, limit=1
              $region41: #{cnn_cifar_forward.3} parent=39 // loop_pre_header
                _
              $region42: #{cnn_cifar_forward.3} parent=39 // loop_header
                %s146 = sphi 0, %s150
                %p147 = scmp.ge.s32.totalorder %s146, 1
                %s151 = sphi %s137, %s137
                %s152 = sphi %s134, %s134
              $region43: #{cnn_cifar_forward.3} parent=39 // loop_header_branch
                %149 = sbr.rel (%p147) target = $region47
              $region44: #{cnn_cifar_forward.3} parent=39 // loop_body
                %v153 = vld [vmem:[%s151] sm:$0xff]
                %154 = vst [vmem:[%s152] sm:$0xff] %v153
                %v155 = vld [vmem:[%s151 + $0x10] sm:$0xff]
                %156 = vst [vmem:[%s152 + $0x8] sm:$0xff] %v155
                %v157 = vld [vmem:[%s151 + $0x20] sm:$0xff]
                %158 = vst [vmem:[%s152 + $0x10] sm:$0xff] %v157
                %v159 = vld [vmem:[%s151 + $0x30] sm:$0xff]
                %160 = vst [vmem:[%s152 + $0x18] sm:$0xff] %v159
                %v161 = vld [vmem:[%s151 + $0x40] sm:$0xff]
                %162 = vst [vmem:[%s152 + $0x20] sm:$0xff] %v161
                %v163 = vld [vmem:[%s151 + $0x50] sm:$0xff]
                %164 = vst [vmem:[%s152 + $0x28] sm:$0xff] %v163
                %v165 = vld [vmem:[%s151 + $0x60] sm:$0xff]
                %166 = vst [vmem:[%s152 + $0x30] sm:$0xff] %v165
                %v167 = vld [vmem:[%s151 + $0x70] sm:$0xff]
                %168 = vst [vmem:[%s152 + $0x38] sm:$0xff] %v167
                %v169 = vld [vmem:[%s151 + $0x80] sm:$0xff]
                %170 = vst [vmem:[%s152 + $0x40] sm:$0xff] %v169
                %v171 = vld [vmem:[%s151 + $0x90] sm:$0xff]
                %172 = vst [vmem:[%s152 + $0x48] sm:$0xff] %v171
                %v173 = vld [vmem:[%s151 + $0xa0] sm:$0xff]
                %174 = vst [vmem:[%s152 + $0x50] sm:$0xff] %v173
                %v175 = vld [vmem:[%s151 + $0xb0] sm:$0xff]
                %176 = vst [vmem:[%s152 + $0x58] sm:$0xff] %v175
                %v177 = vld [vmem:[%s151 + $0xc0] sm:$0xff]
                %178 = vst [vmem:[%s152 + $0x60] sm:$0xff] %v177
                %v179 = vld [vmem:[%s151 + $0xd0] sm:$0xff]
                %180 = vst [vmem:[%s152 + $0x68] sm:$0xff] %v179
                %v181 = vld [vmem:[%s151 + $0xe0] sm:$0xff]
                %182 = vst [vmem:[%s152 + $0x70] sm:$0xff] %v181
                %v183 = vld [vmem:[%s151 + $0xf0] sm:$0xff]
                %184 = vst [vmem:[%s152 + $0x78] sm:$0xff] %v183
                %v185 = vld [vmem:[%s151 + $0x100] sm:$0xff]
                %186 = vst [vmem:[%s152 + $0x80] sm:$0xff] %v185
                %v187 = vld [vmem:[%s151 + $0x110] sm:$0xff]
                %188 = vst [vmem:[%s152 + $0x88] sm:$0xff] %v187
                %v189 = vld [vmem:[%s151 + $0x120] sm:$0xff]
                %190 = vst [vmem:[%s152 + $0x90] sm:$0xff] %v189
                %v191 = vld [vmem:[%s151 + $0x130] sm:$0xff]
                %192 = vst [vmem:[%s152 + $0x98] sm:$0xff] %v191
                %v193 = vld [vmem:[%s151 + $0x140] sm:$0xff]
                %194 = vst [vmem:[%s152 + $0xa0] sm:$0xff] %v193
                %v195 = vld [vmem:[%s151 + $0x150] sm:$0xff]
                %196 = vst [vmem:[%s152 + $0xa8] sm:$0xff] %v195
                %v197 = vld [vmem:[%s151 + $0x160] sm:$0xff]
                %198 = vst [vmem:[%s152 + $0xb0] sm:$0xff] %v197
                %v199 = vld [vmem:[%s151 + $0x170] sm:$0xff]
                %200 = vst [vmem:[%s152 + $0xb8] sm:$0xff] %v199
                %v201 = vld [vmem:[%s151 + $0x180] sm:$0xff]
                %202 = vst [vmem:[%s152 + $0xc0] sm:$0xff] %v201
                %v203 = vld [vmem:[%s151 + $0x190] sm:$0xff]
                %204 = vst [vmem:[%s152 + $0xc8] sm:$0xff] %v203
                %v205 = vld [vmem:[%s151 + $0x1a0] sm:$0xff]
                %206 = vst [vmem:[%s152 + $0xd0] sm:$0xff] %v205
                %v207 = vld [vmem:[%s151 + $0x1b0] sm:$0xff]
                %208 = vst [vmem:[%s152 + $0xd8] sm:$0xff] %v207
                %v209 = vld [vmem:[%s151 + $0x1c0] sm:$0xff]
                %210 = vst [vmem:[%s152 + $0xe0] sm:$0xff] %v209
                %v211 = vld [vmem:[%s151 + $0x1d0] sm:$0xff]
                %212 = vst [vmem:[%s152 + $0xe8] sm:$0xff] %v211
                %v213 = vld [vmem:[%s151 + $0x1e0] sm:$0xff]
                %214 = vst [vmem:[%s152 + $0xf0] sm:$0xff] %v213
                %v215 = vld [vmem:[%s151 + $0x1f0] sm:$0xff]
                %216 = vst [vmem:[%s152 + $0xf8] sm:$0xff] %v215
                %v217 = vld [vmem:[%s151 + $0x200] sm:$0xff]
                %218 = vst [vmem:[%s152 + $0x100] sm:$0xff] %v217
                %v219 = vld [vmem:[%s151 + $0x210] sm:$0xff]
                %220 = vst [vmem:[%s152 + $0x108] sm:$0xff] %v219
                %v221 = vld [vmem:[%s151 + $0x220] sm:$0xff]
                %222 = vst [vmem:[%s152 + $0x110] sm:$0xff] %v221
                %v223 = vld [vmem:[%s151 + $0x230] sm:$0xff]
                %224 = vst [vmem:[%s152 + $0x118] sm:$0xff] %v223
                %v225 = vld [vmem:[%s151 + $0x240] sm:$0xff]
                %226 = vst [vmem:[%s152 + $0x120] sm:$0xff] %v225
                %v227 = vld [vmem:[%s151 + $0x250] sm:$0xff]
                %228 = vst [vmem:[%s152 + $0x128] sm:$0xff] %v227
                %v229 = vld [vmem:[%s151 + $0x260] sm:$0xff]
                %230 = vst [vmem:[%s152 + $0x130] sm:$0xff] %v229
                %v231 = vld [vmem:[%s151 + $0x270] sm:$0xff]
                %232 = vst [vmem:[%s152 + $0x138] sm:$0xff] %v231
              $region45: #{cnn_cifar_forward.3} parent=39 // loop_footer
                %s150 = sadd.s32 1, %s146
              $region46: #{cnn_cifar_forward.3} parent=39 // loop_footer_branch
                %145 = sbr.rel target = $region42
              $region47: #{cnn_cifar_forward.3} parent=39 // loop_exit
                _
            $region40: #{cnn_cifar_forward.3} parent=31 // pred_fallthru
              _
          $region32: #{cnn_cifar_forward.3} parent=27 // pred_fallthru
            _
          %325 = vnop
        $region28: #{cnn_cifar_forward.3} parent=23 // pred_fallthru
          _
      $region24: #{cnn_cifar_forward.3} parent=5 // pred_fallthru
        _
      %p326 = scmp.le.s32.totalorder 1, %s9
      %p327 = scmp.lt.s32.totalorder %s9, 3
      %p328 = pnand %p326, %p327
      %p329 = pneg %p328
      // Predicated region
      $region63: #{cnn_cifar_forward.3} parent=5 // pred_check
        _
      $region64: #{cnn_cifar_forward.3} parent=5 // pred_check_branch
        %331 = sbr.rel (%p328) target = $region66
      $region65: #{cnn_cifar_forward.3} parent=5 // pred_region
        %s332 = ssub.s32 %s9, 1
        %s333 = sand.u32 %s22, 1
        %s334 = sand.u32 %s22, 1
        %s335 = smul.addr %s334, 320
        %s336 = scalar_lea.vmem [#allocation2], %s335
        // Predicated region
        $region67: #{cnn_cifar_forward.3} parent=65 // pred_check
          %p337 = pneg %p35
        $region68: #{cnn_cifar_forward.3} parent=65 // pred_check_branch
          %339 = sbr.rel (%p337) target = $region70
        $region69: #{cnn_cifar_forward.3} parent=65 // pred_region
          _
        $region70: #{cnn_cifar_forward.3} parent=65 // pred_fallthru
          _
        %s340 = sand.u32 %s22, 1
        %s341 = sand.u32 %s22, 1
        %s342 = smul.addr %s341, 320
        %s343 = scalar_lea.vmem [#allocation2], %s342
        %p344 = pneg %p35
        %p345 = pneg %p32
        %p346 = pneg %p56
        %p347 = pneg %p53
        %p348 = pneg %p77
        %p349 = pneg %p74
        %p350 = pneg %p103
        %p351 = pneg %p100
        %s352 = smul.u32 2, %s14
        %p353 = scmp.lt.s32.totalorder %s352, 3
        %s354 = scalar_select %p353, %s352, 3
        %s355 = smul.addr %s354, 4
        %s356 = scalar_lea.vmem %s3, %s355
        %s357 = smul.u32 2, %s14
        %s358 = smul.u32 2, %s14
        %p359 = scmp.lt.s32.totalorder %s358, 3
        %s360 = scalar_select %p359, %s358, 3
        %s361 = smul.addr %s360, 4
        %s362 = scalar_lea.vmem %s3, %s361
        %s363 = smul.u32 2, %s14
        %v365 = vld [vmem:[%s1] sm:$0xf]
        %v366 = vld [vmem:[%s336] sm:$0xff]
        %v367 = vld [vmem:[%s336 + $0x8] sm:$0xff]
        %v368 = vld [vmem:[%s336 + $0x10] sm:$0xff]
        %v369 = vld [vmem:[%s336 + $0x18] sm:$0xff]
        %v370 = vld [vmem:[%s336 + $0x20] sm:$0xff]
        %v371 = vld [vmem:[%s336 + $0x28] sm:$0xff]
        %v372 = vld [vmem:[%s336 + $0x30] sm:$0xff]
        %v373 = vld [vmem:[%s336 + $0x38] sm:$0xff]
        %v374 = vld [vmem:[%s336 + $0x40] sm:$0xff]
        %v375 = vld [vmem:[%s336 + $0x48] sm:$0x33]
        %v386 = vunpack.c.l.b16 %v366
        %v387 = vunpack.c.h.b16 %v366
        %v388 = vunpack.c.l.b16 %v367
        %v389 = vunpack.c.h.b16 %v367
        %v390 = vunpack.c.l.b16 %v368
        %v391 = vunpack.c.h.b16 %v368
        %v392 = vunpack.c.l.b16 %v369
        %v393 = vunpack.c.h.b16 %v369
        %v394 = vunpack.c.l.b16 %v370
        %v395 = vunpack.c.h.b16 %v370
        %v396 = vunpack.c.l.b16 %v371
        %v397 = vunpack.c.h.b16 %v371
        %v398 = vunpack.c.l.b16 %v372
        %v399 = vunpack.c.h.b16 %v372
        %v400 = vunpack.c.l.b16 %v373
        %v401 = vunpack.c.h.b16 %v373
        %v402 = vunpack.c.l.b16 %v374
        %v403 = vunpack.c.h.b16 %v374
        %v404 = vunpack.c.l.b16 %v375
        %v405 = vunpack.c.h.b16 %v375
        %v406 = vpack.c.b16 %v388, %v386
        %v407 = vpack.c.b16 %v389, %v387
        %v408 = vpack.c.b16 %v392, %v390
        %v409 = vpack.c.b16 %v393, %v391
        %v410 = vpack.c.b16 %v396, %v394
        %v411 = vpack.c.b16 %v397, %v395
        %v412 = vpack.c.b16 %v400, %v398
        %v413 = vpack.c.b16 %v401, %v399
        %v414 = vpack.c.b16 %v404, %v402
        %v415 = vpack.c.b16 %v405, %v403
        %vm424 = vcmask 613376
        %v426 = vsel %vm424, %v365, 0
        %vm428 = vcmask 1044480
        %vm429 = vcmask 1045504
        %v430 = vsel %vm428, 4294967295, 65535
        %v431 = vsel %vm429, %v430, 0
        %v433 = vand.u32 %v414, %v431
        %v436 = vand.u32 %v415, %v431
        %438 = vmatprep.subr.bf16.mxu0 %v407
        %439 = vmatpush1.bf16.msra.mxu0 %v406
        %440 = vmatprep.subr.bf16.mxu0 %v409
        %441 = vmatpush1.bf16.msra.mxu0 %v408
        %442 = vmatprep.subr.bf16.mxu0 %v411
        %443 = vmatpush1.bf16.msra.mxu0 %v410
        %444 = vmatprep.subr.bf16.mxu0 %v413
        %445 = vmatpush1.bf16.msra.mxu0 %v412
        %446 = vmatprep.subr.bf16.mxu0 %v436
        %447 = vmatpush1.bf16.msra.mxu0 %v433
        %448 = vmatprep.subr.bf16.mxu0 0
        %449 = vmatpush1.bf16.msra.mxu0 0
        %450 = vmatprep.subr.bf16.mxu0 0
        %451 = vmatpush1.bf16.msra.mxu0 0
        %452 = vmatprep.subr.bf16.mxu0 0
        %453 = vmatpush1.bf16.msra.mxu0 0
        %454 = vmatprep.subr.bf16.mxu0 0
        %455 = vmatpush1.bf16.msra.mxu0 0
        %456 = vmatprep.subr.bf16.mxu0 0
        %457 = vmatpush1.bf16.msra.mxu0 0
        %458 = vmatprep.subr.bf16.mxu0 0
        %459 = vmatpush1.bf16.msra.mxu0 0
        %460 = vmatprep.subr.bf16.mxu0 0
        %461 = vmatpush1.bf16.msra.mxu0 0
        %462 = vmatprep.subr.bf16.mxu0 0
        %463 = vmatpush1.bf16.msra.mxu0 0
        %464 = vmatprep.subr.bf16.mxu0 0
        %465 = vmatpush1.bf16.msra.mxu0 0
        %466 = vmatprep.subr.bf16.mxu0 0
        %467 = vmatpush1.bf16.msra.mxu0 0
        %468 = vmatprep.subr.bf16.mxu0 0
        %469 = vmatpush1.bf16.msra.mxu0 0
        %470 = vmatprep.mubr.bf16.mxu0 0
        %471 = vmatmul.mubr.bf16.gmra.mrb[0].mxu0 %v426
        %v472 = vpop.f32.mrb[0].mxu0
        %v473 = vadd.f32 0.0, %v472
        %v474 = vpop.f32.mrb[0].mxu0
        %v475 = vadd.f32 0.0, %v474
        %v476 = vpop.f32.mrb[0].mxu0
        %v477 = vpop.f32.mrb[0].mxu0
        %478 = vdwg.mxu0
        %s479 = scalar_lea.vmem %s336, 80 [#allocation2]
        %v480 = vld [vmem:[%s479] sm:$0xff]
        %v481 = vld [vmem:[%s479 + $0x8] sm:$0xff]
        %v482 = vld [vmem:[%s479 + $0x10] sm:$0xff]
        %v483 = vld [vmem:[%s479 + $0x18] sm:$0xff]
        %v484 = vld [vmem:[%s479 + $0x20] sm:$0xff]
        %v485 = vld [vmem:[%s479 + $0x28] sm:$0xff]
        %v486 = vld [vmem:[%s479 + $0x30] sm:$0xff]
        %v487 = vld [vmem:[%s479 + $0x38] sm:$0xff]
        %v488 = vld [vmem:[%s479 + $0x40] sm:$0xff]
        %v489 = vld [vmem:[%s479 + $0x48] sm:$0x33]
        %v500 = vunpack.c.l.b16 %v480
        %v501 = vunpack.c.h.b16 %v480
        %v502 = vunpack.c.l.b16 %v481
        %v503 = vunpack.c.h.b16 %v481
        %v504 = vunpack.c.l.b16 %v482
        %v505 = vunpack.c.h.b16 %v482
        %v506 = vunpack.c.l.b16 %v483
        %v507 = vunpack.c.h.b16 %v483
        %v508 = vunpack.c.l.b16 %v484
        %v509 = vunpack.c.h.b16 %v484
        %v510 = vunpack.c.l.b16 %v485
        %v511 = vunpack.c.h.b16 %v485
        %v512 = vunpack.c.l.b16 %v486
        %v513 = vunpack.c.h.b16 %v486
        %v514 = vunpack.c.l.b16 %v487
        %v515 = vunpack.c.h.b16 %v487
        %v516 = vunpack.c.l.b16 %v488
        %v517 = vunpack.c.h.b16 %v488
        %v518 = vunpack.c.l.b16 %v489
        %v519 = vunpack.c.h.b16 %v489
        %v520 = vpack.c.b16 %v502, %v500
        %v521 = vpack.c.b16 %v503, %v501
        %v522 = vpack.c.b16 %v506, %v504
        %v523 = vpack.c.b16 %v507, %v505
        %v524 = vpack.c.b16 %v510, %v508
        %v525 = vpack.c.b16 %v511, %v509
        %v526 = vpack.c.b16 %v514, %v512
        %v527 = vpack.c.b16 %v515, %v513
        %v528 = vpack.c.b16 %v518, %v516
        %v529 = vpack.c.b16 %v519, %v517
        %v539 = vand.u32 %v528, %v431
        %v542 = vand.u32 %v529, %v431
        %544 = vmatprep.subr.bf16.mxu0 %v521
        %545 = vmatpush1.bf16.msra.mxu0 %v520
        %546 = vmatprep.subr.bf16.mxu0 %v523
        %547 = vmatpush1.bf16.msra.mxu0 %v522
        %548 = vmatprep.subr.bf16.mxu0 %v525
        %549 = vmatpush1.bf16.msra.mxu0 %v524
        %550 = vmatprep.subr.bf16.mxu0 %v527
        %551 = vmatpush1.bf16.msra.mxu0 %v526
        %552 = vmatprep.subr.bf16.mxu0 %v542
        %553 = vmatpush1.bf16.msra.mxu0 %v539
        %554 = vmatprep.subr.bf16.mxu0 0
        %555 = vmatpush1.bf16.msra.mxu0 0
        %556 = vmatprep.subr.bf16.mxu0 0
        %557 = vmatpush1.bf16.msra.mxu0 0
        %558 = vmatprep.subr.bf16.mxu0 0
        %559 = vmatpush1.bf16.msra.mxu0 0
        %560 = vmatprep.subr.bf16.mxu0 0
        %561 = vmatpush1.bf16.msra.mxu0 0
        %562 = vmatprep.subr.bf16.mxu0 0
        %563 = vmatpush1.bf16.msra.mxu0 0
        %564 = vmatprep.subr.bf16.mxu0 0
        %565 = vmatpush1.bf16.msra.mxu0 0
        %566 = vmatprep.subr.bf16.mxu0 0
        %567 = vmatpush1.bf16.msra.mxu0 0
        %568 = vmatprep.subr.bf16.mxu0 0
        %569 = vmatpush1.bf16.msra.mxu0 0
        %570 = vmatprep.subr.bf16.mxu0 0
        %571 = vmatpush1.bf16.msra.mxu0 0
        %572 = vmatprep.subr.bf16.mxu0 0
        %573 = vmatpush1.bf16.msra.mxu0 0
        %574 = vmatprep.subr.bf16.mxu0 0
        %575 = vmatpush1.bf16.msra.mxu0 0
        %576 = vmatprep.mubr.bf16.mxu0 0
        %577 = vmatmul.mubr.bf16.gmra.mrb[0].mxu0 %v426
        %v578 = vpop.f32.mrb[0].mxu0
        %v579 = vadd.f32 0.0, %v578
        %v580 = vpop.f32.mrb[0].mxu0
        %v581 = vadd.f32 0.0, %v580
        %v582 = vpop.f32.mrb[0].mxu0
        %v583 = vpop.f32.mrb[0].mxu0
        %584 = vdwg.mxu0
        %v585 = vmax.f32 %v473, %v579
        %v586 = vmax.f32 %v475, %v581
        %s587 = scalar_lea.vmem %s336, 160 [#allocation2]
        %v588 = vld [vmem:[%s587] sm:$0xff]
        %v589 = vld [vmem:[%s587 + $0x8] sm:$0xff]
        %v590 = vld [vmem:[%s587 + $0x10] sm:$0xff]
        %v591 = vld [vmem:[%s587 + $0x18] sm:$0xff]
        %v592 = vld [vmem:[%s587 + $0x20] sm:$0xff]
        %v593 = vld [vmem:[%s587 + $0x28] sm:$0xff]
        %v594 = vld [vmem:[%s587 + $0x30] sm:$0xff]
        %v595 = vld [vmem:[%s587 + $0x38] sm:$0xff]
        %v596 = vld [vmem:[%s587 + $0x40] sm:$0xff]
        %v597 = vld [vmem:[%s587 + $0x48] sm:$0x33]
        %v608 = vunpack.c.l.b16 %v588
        %v609 = vunpack.c.h.b16 %v588
        %v610 = vunpack.c.l.b16 %v589
        %v611 = vunpack.c.h.b16 %v589
        %v612 = vunpack.c.l.b16 %v590
        %v613 = vunpack.c.h.b16 %v590
        %v614 = vunpack.c.l.b16 %v591
        %v615 = vunpack.c.h.b16 %v591
        %v616 = vunpack.c.l.b16 %v592
        %v617 = vunpack.c.h.b16 %v592
        %v618 = vunpack.c.l.b16 %v593
        %v619 = vunpack.c.h.b16 %v593
        %v620 = vunpack.c.l.b16 %v594
        %v621 = vunpack.c.h.b16 %v594
        %v622 = vunpack.c.l.b16 %v595
        %v623 = vunpack.c.h.b16 %v595
        %v624 = vunpack.c.l.b16 %v596
        %v625 = vunpack.c.h.b16 %v596
        %v626 = vunpack.c.l.b16 %v597
        %v627 = vunpack.c.h.b16 %v597
        %v628 = vpack.c.b16 %v610, %v608
        %v629 = vpack.c.b16 %v611, %v609
        %v630 = vpack.c.b16 %v614, %v612
        %v631 = vpack.c.b16 %v615, %v613
        %v632 = vpack.c.b16 %v618, %v616
        %v633 = vpack.c.b16 %v619, %v617
        %v634 = vpack.c.b16 %v622, %v620
        %v635 = vpack.c.b16 %v623, %v621
        %v636 = vpack.c.b16 %v626, %v624
        %v637 = vpack.c.b16 %v627, %v625
        %v647 = vand.u32 %v636, %v431
        %v650 = vand.u32 %v637, %v431
        %652 = vmatprep.subr.bf16.mxu0 %v629
        %653 = vmatpush1.bf16.msra.mxu0 %v628
        %654 = vmatprep.subr.bf16.mxu0 %v631
        %655 = vmatpush1.bf16.msra.mxu0 %v630
        %656 = vmatprep.subr.bf16.mxu0 %v633
        %657 = vmatpush1.bf16.msra.mxu0 %v632
        %658 = vmatprep.subr.bf16.mxu0 %v635
        %659 = vmatpush1.bf16.msra.mxu0 %v634
        %660 = vmatprep.subr.bf16.mxu0 %v650
        %661 = vmatpush1.bf16.msra.mxu0 %v647
        %662 = vmatprep.subr.bf16.mxu0 0
        %663 = vmatpush1.bf16.msra.mxu0 0
        %664 = vmatprep.subr.bf16.mxu0 0
        %665 = vmatpush1.bf16.msra.mxu0 0
        %666 = vmatprep.subr.bf16.mxu0 0
        %667 = vmatpush1.bf16.msra.mxu0 0
        %668 = vmatprep.subr.bf16.mxu0 0
        %669 = vmatpush1.bf16.msra.mxu0 0
        %670 = vmatprep.subr.bf16.mxu0 0
        %671 = vmatpush1.bf16.msra.mxu0 0
        %672 = vmatprep.subr.bf16.mxu0 0
        %673 = vmatpush1.bf16.msra.mxu0 0
        %674 = vmatprep.subr.bf16.mxu0 0
        %675 = vmatpush1.bf16.msra.mxu0 0
        %676 = vmatprep.subr.bf16.mxu0 0
        %677 = vmatpush1.bf16.msra.mxu0 0
        %678 = vmatprep.subr.bf16.mxu0 0
        %679 = vmatpush1.bf16.msra.mxu0 0
        %680 = vmatprep.subr.bf16.mxu0 0
        %681 = vmatpush1.bf16.msra.mxu0 0
        %682 = vmatprep.subr.bf16.mxu0 0
        %683 = vmatpush1.bf16.msra.mxu0 0
        %684 = vmatprep.mubr.bf16.mxu0 0
        %685 = vmatmul.mubr.bf16.gmra.mrb[0].mxu0 %v426
        %v686 = vpop.f32.mrb[0].mxu0
        %v687 = vadd.f32 0.0, %v686
        %v688 = vpop.f32.mrb[0].mxu0
        %v689 = vadd.f32 0.0, %v688
        %v690 = vpop.f32.mrb[0].mxu0
        %v691 = vpop.f32.mrb[0].mxu0
        %692 = vdwg.mxu0
        %v693 = vmax.f32 %v585, %v687
        %v694 = vmax.f32 %v586, %v689
        %s695 = scalar_lea.vmem %s336, 240 [#allocation2]
        %v696 = vld [vmem:[%s695] sm:$0xff]
        %v697 = vld [vmem:[%s695 + $0x8] sm:$0xff]
        %v698 = vld [vmem:[%s695 + $0x10] sm:$0xff]
        %v699 = vld [vmem:[%s695 + $0x18] sm:$0xff]
        %v700 = vld [vmem:[%s695 + $0x20] sm:$0xff]
        %v701 = vld [vmem:[%s695 + $0x28] sm:$0xff]
        %v702 = vld [vmem:[%s695 + $0x30] sm:$0xff]
        %v703 = vld [vmem:[%s695 + $0x38] sm:$0xff]
        %v704 = vld [vmem:[%s695 + $0x40] sm:$0xff]
        %v705 = vld [vmem:[%s695 + $0x48] sm:$0x33]
        %v716 = vunpack.c.l.b16 %v696
        %v717 = vunpack.c.h.b16 %v696
        %v718 = vunpack.c.l.b16 %v697
        %v719 = vunpack.c.h.b16 %v697
        %v720 = vunpack.c.l.b16 %v698
        %v721 = vunpack.c.h.b16 %v698
        %v722 = vunpack.c.l.b16 %v699
        %v723 = vunpack.c.h.b16 %v699
        %v724 = vunpack.c.l.b16 %v700
        %v725 = vunpack.c.h.b16 %v700
        %v726 = vunpack.c.l.b16 %v701
        %v727 = vunpack.c.h.b16 %v701
        %v728 = vunpack.c.l.b16 %v702
        %v729 = vunpack.c.h.b16 %v702
        %v730 = vunpack.c.l.b16 %v703
        %v731 = vunpack.c.h.b16 %v703
        %v732 = vunpack.c.l.b16 %v704
        %v733 = vunpack.c.h.b16 %v704
        %v734 = vunpack.c.l.b16 %v705
        %v735 = vunpack.c.h.b16 %v705
        %v736 = vpack.c.b16 %v718, %v716
        %v737 = vpack.c.b16 %v719, %v717
        %v738 = vpack.c.b16 %v722, %v720
        %v739 = vpack.c.b16 %v723, %v721
        %v740 = vpack.c.b16 %v726, %v724
        %v741 = vpack.c.b16 %v727, %v725
        %v742 = vpack.c.b16 %v730, %v728
        %v743 = vpack.c.b16 %v731, %v729
        %v744 = vpack.c.b16 %v734, %v732
        %v745 = vpack.c.b16 %v735, %v733
        %v755 = vand.u32 %v744, %v431
        %v758 = vand.u32 %v745, %v431
        %760 = vmatprep.subr.bf16.mxu0 %v737
        %761 = vmatpush1.bf16.msra.mxu0 %v736
        %762 = vmatprep.subr.bf16.mxu0 %v739
        %763 = vmatpush1.bf16.msra.mxu0 %v738
        %764 = vmatprep.subr.bf16.mxu0 %v741
        %765 = vmatpush1.bf16.msra.mxu0 %v740
        %766 = vmatprep.subr.bf16.mxu0 %v743
        %767 = vmatpush1.bf16.msra.mxu0 %v742
        %768 = vmatprep.subr.bf16.mxu0 %v758
        %769 = vmatpush1.bf16.msra.mxu0 %v755
        %770 = vmatprep.subr.bf16.mxu0 0
        %771 = vmatpush1.bf16.msra.mxu0 0
        %772 = vmatprep.subr.bf16.mxu0 0
        %773 = vmatpush1.bf16.msra.mxu0 0
        %774 = vmatprep.subr.bf16.mxu0 0
        %775 = vmatpush1.bf16.msra.mxu0 0
        %776 = vmatprep.subr.bf16.mxu0 0
        %777 = vmatpush1.bf16.msra.mxu0 0
        %778 = vmatprep.subr.bf16.mxu0 0
        %779 = vmatpush1.bf16.msra.mxu0 0
        %780 = vmatprep.subr.bf16.mxu0 0
        %781 = vmatpush1.bf16.msra.mxu0 0
        %782 = vmatprep.subr.bf16.mxu0 0
        %783 = vmatpush1.bf16.msra.mxu0 0
        %784 = vmatprep.subr.bf16.mxu0 0
        %785 = vmatpush1.bf16.msra.mxu0 0
        %786 = vmatprep.subr.bf16.mxu0 0
        %787 = vmatpush1.bf16.msra.mxu0 0
        %788 = vmatprep.subr.bf16.mxu0 0
        %789 = vmatpush1.bf16.msra.mxu0 0
        %790 = vmatprep.subr.bf16.mxu0 0
        %791 = vmatpush1.bf16.msra.mxu0 0
        %792 = vmatprep.mubr.bf16.mxu0 0
        %793 = vmatmul.mubr.bf16.gmra.mrb[0].mxu0 %v426
        %v794 = vpop.f32.mrb[0].mxu0
        %v795 = vadd.f32 0.0, %v794
        %v796 = vpop.f32.mrb[0].mxu0
        %v797 = vadd.f32 0.0, %v796
        %v798 = vpop.f32.mrb[0].mxu0
        %v799 = vpop.f32.mrb[0].mxu0
        %800 = vdwg.mxu0
        %v801 = vmax.f32 %v693, %v795
        %v802 = vmax.f32 %v694, %v797
        %v803 = vld [vmem:[%s2] sm:$0xff]
        %805 = vset.pattern.permute.xlu0 0
        %806 = vperm.xlu0 %805, %v803
        %v807 = vpop.permute.xlu0 %806
        %v809 = vadd.f32 %v801, %v807
        %v810 = vadd.f32 %v802, %v807
        %v811 = vmax.f32 %v809, 0.0
        %v812 = vmax.f32 %v810, 0.0
        %v813 = vpack.c.bf16 %v811, %v811
        %v814 = vpack.c.bf16 %v812, %v812
        %v817 = vunpack.c.l.b16 %v813
        %v818 = vunpack.c.l.b16 %v814
        %v819 = vpack.c.b16 %v818, %v817
        %821 = vst [vmem:[%s362] sm:$0xff] %v819
        %s822 = smul.u32 2, %s14
        %p823 = scmp.lt.s32.totalorder %s822, 3
        %s824 = scalar_select %p823, %s822, 3
        %s825 = smul.addr %s824, 4
        %s826 = scalar_lea.vmem %s3, %s825
        // Predicated region
        $region71: #{cnn_cifar_forward.3} parent=65 // pred_check
          %p827 = pneg %p100
        $region72: #{cnn_cifar_forward.3} parent=65 // pred_check_branch
          %829 = sbr.rel (%p827) target = $region74
        $region73: #{cnn_cifar_forward.3} parent=65 // pred_region
          %s830 = smul.u32 2, %s14
        $region74: #{cnn_cifar_forward.3} parent=65 // pred_fallthru
          _
      $region66: #{cnn_cifar_forward.3} parent=5 // pred_fallthru
        _
      %p831 = scmp.le.s32.totalorder 2, %s9
      // Predicated region
      $region75: #{cnn_cifar_forward.3} parent=5 // pred_check
        %p832 = pneg %p831
      $region76: #{cnn_cifar_forward.3} parent=5 // pred_check_branch
        %834 = sbr.rel (%p832) target = $region78
      $region77: #{cnn_cifar_forward.3} parent=5 // pred_region
        %s835 = ssub.s32 %s9, 2
        // Predicated region
        $region79: #{cnn_cifar_forward.3} parent=77 // pred_check
          %p836 = pneg %p106
        $region80: #{cnn_cifar_forward.3} parent=77 // pred_check_branch
          %838 = sbr.rel (%p836) target = $region82
        $region81: #{cnn_cifar_forward.3} parent=77 // pred_region
          %s839 = smul.u32 2, %s15
          %p840 = scmp.lt.s32.totalorder %s839, 3
          %s841 = scalar_select %p840, %s839, 3
          %s842 = smul.addr %s841, 4
          %s843 = scalar_lea.vmem %s3, %s842
        $region82: #{cnn_cifar_forward.3} parent=77 // pred_fallthru
          _
      $region78: #{cnn_cifar_forward.3} parent=5 // pred_fallthru
        _
    $region6: #{cnn_cifar_forward.3} parent=1 // loop_footer
      %s13 = sadd.s32 1, %s9
    $region7: #{cnn_cifar_forward.3} parent=1 // loop_footer_branch
      %8 = sbr.rel target = $region3
    $region8: #{cnn_cifar_forward.3} parent=1 // loop_exit
      _

// kernel: cnn_cifar_forward.4
$region0: #{cnn_cifar_forward.4}
  #allocation0 [shape = 'u32[]', space=smem, size = 0x4, offset = 0x4, fixed_abs, tag = 'smem constant byte address 0x4 - core index']
  #allocation1 [shape = 'u32[144,128]{1,0:T(1,128)}', space=vmem, size = 0x12000, scoped, tag = 'internal scratch']
  %s0 = inlined_call_operand.vmem [shape: bf16[4,200,50], index: 0, kind: input, shape index: {}]
  %s1 = inlined_call_operand.vmem [shape: bf16[16,200], index: 1, kind: input, shape index: {}]
  %s2 = inlined_call_operand.vmem [shape: f32[16,1], index: 2, kind: input, shape index: {}]
  %s3 = inlined_call_operand.vmem [shape: f32[16,50], index: 3, kind: output, shape index: {}]
  %s4 = sld [smem:[#allocation0]]
  $region22: #{cnn_cifar_forward.4} parent=0
    _
  %s6 = ssub.s32 1, %s4
  %s7 = scalar_select 0, %s6, %s4
  // Predicated region
  $region2: #{cnn_cifar_forward.4} parent=0 // pred_check
    _
  $region3: #{cnn_cifar_forward.4} parent=0 // pred_check_branch
    %9 = sbr.rel (0) target = $region5
  $region4: #{cnn_cifar_forward.4} parent=0 // pred_region
    _
  $region5: #{cnn_cifar_forward.4} parent=0 // pred_fallthru
    _
  // Predicated region
  $region6: #{cnn_cifar_forward.4} parent=0 // pred_check
    _
  $region7: #{cnn_cifar_forward.4} parent=0 // pred_check_branch
    %11 = sbr.rel (0) target = $region9
  $region8: #{cnn_cifar_forward.4} parent=0 // pred_region
    _
  $region9: #{cnn_cifar_forward.4} parent=0 // pred_fallthru
    _
  // Predicated region
  $region10: #{cnn_cifar_forward.4} parent=0 // pred_check
    _
  $region11: #{cnn_cifar_forward.4} parent=0 // pred_check_branch
    %13 = sbr.rel (0) target = $region13
  $region12: #{cnn_cifar_forward.4} parent=0 // pred_region
    _
  $region13: #{cnn_cifar_forward.4} parent=0 // pred_fallthru
    _
  %v15 = vld [vmem:[%s1] sm:$0xff]
  %v16 = vld [vmem:[%s1 + $0x8] sm:$0xff]
  %v17 = vld [vmem:[%s0] sm:$0xf]
  %v18 = vld [vmem:[%s0 + $0x4] sm:$0xf]
  %v19 = vld [vmem:[%s0 + $0x8] sm:$0xf]
  %v20 = vld [vmem:[%s0 + $0xc] sm:$0xf]
  %v21 = vld [vmem:[%s0 + $0x10] sm:$0xf]
  %v22 = vld [vmem:[%s0 + $0x14] sm:$0xf]
  %v23 = vld [vmem:[%s0 + $0x18] sm:$0xf]
  %v24 = vld [vmem:[%s0 + $0x1c] sm:$0xf]
  %v25 = vld [vmem:[%s0 + $0x20] sm:$0xf]
  %v26 = vld [vmem:[%s0 + $0x24] sm:$0xf]
  %v27 = vld [vmem:[%s0 + $0x28] sm:$0xf]
  %v28 = vld [vmem:[%s0 + $0x2c] sm:$0xf]
  %v29 = vld [vmem:[%s0 + $0x30] sm:$0xf]
  %v30 = vld [vmem:[%s0 + $0x34] sm:$0xf]
  %v31 = vld [vmem:[%s0 + $0x38] sm:$0xf]
  %v32 = vld [vmem:[%s0 + $0x3c] sm:$0xf]
  %v33 = vld [vmem:[%s0 + $0x40] sm:$0xf]
  %v34 = vld [vmem:[%s0 + $0x44] sm:$0xf]
  %v35 = vld [vmem:[%s0 + $0x48] sm:$0xf]
  %v36 = vld [vmem:[%s0 + $0x4c] sm:$0xf]
  %v37 = vld [vmem:[%s0 + $0x50] sm:$0xf]
  %v38 = vld [vmem:[%s0 + $0x54] sm:$0xf]
  %v39 = vld [vmem:[%s0 + $0x58] sm:$0xf]
  %v40 = vld [vmem:[%s0 + $0x5c] sm:$0xf]
  %v41 = vld [vmem:[%s0 + $0x60] sm:$0xf]
  %v44 = vunpack.c.l.b16 %v15
  %v45 = vunpack.c.h.b16 %v15
  %v46 = vunpack.c.l.b16 %v16
  %v47 = vunpack.c.h.b16 %v16
  %v48 = vpack.c.b16 %v46, %v44
  %v49 = vpack.c.b16 %v47, %v45
  %v76 = vunpack.c.l.b16 %v17
  %v77 = vunpack.c.l.b16 %v18
  %v78 = vunpack.c.l.b16 %v19
  %v79 = vunpack.c.l.b16 %v20
  %v80 = vunpack.c.l.b16 %v21
  %v81 = vunpack.c.l.b16 %v22
  %v82 = vunpack.c.l.b16 %v23
  %v83 = vunpack.c.l.b16 %v24
  %v84 = vunpack.c.l.b16 %v25
  %v85 = vunpack.c.l.b16 %v26
  %v86 = vunpack.c.l.b16 %v27
  %v87 = vunpack.c.l.b16 %v28
  %v88 = vunpack.c.l.b16 %v29
  %v89 = vunpack.c.l.b16 %v30
  %v90 = vunpack.c.l.b16 %v31
  %v91 = vunpack.c.l.b16 %v32
  %v92 = vunpack.c.l.b16 %v33
  %v93 = vunpack.c.l.b16 %v34
  %v94 = vunpack.c.l.b16 %v35
  %v95 = vunpack.c.l.b16 %v36
  %v96 = vunpack.c.l.b16 %v37
  %v97 = vunpack.c.l.b16 %v38
  %v98 = vunpack.c.l.b16 %v39
  %v99 = vunpack.c.l.b16 %v40
  %v100 = vunpack.c.l.b16 %v41
  %v101 = vpack.c.b16 %v77, %v76
  %v102 = vpack.c.b16 %v79, %v78
  %v103 = vpack.c.b16 %v81, %v80
  %v104 = vpack.c.b16 %v83, %v82
  %v105 = vpack.c.b16 %v85, %v84
  %v106 = vpack.c.b16 %v87, %v86
  %v107 = vpack.c.b16 %v89, %v88
  %v108 = vpack.c.b16 %v91, %v90
  %v109 = vpack.c.b16 %v93, %v92
  %v110 = vpack.c.b16 %v95, %v94
  %v111 = vpack.c.b16 %v97, %v96
  %v112 = vpack.c.b16 %v99, %v98
  %v113 = vpack.c.b16 %v100, %v100
  %vm126 = vcmask 588800
  %v128 = vsel %vm126, %v49, 0
  %vm130 = vcmask 1043456
  %v132 = vsel %vm130, %v113, 0
  %134 = vmatprep.subr.bf16.mxu0 0
  %135 = vmatpush1.bf16.msra.mxu0 %v101
  %136 = vmatprep.subr.bf16.mxu0 0
  %137 = vmatpush1.bf16.msra.mxu0 %v102
  %138 = vmatprep.subr.bf16.mxu0 0
  %139 = vmatpush1.bf16.msra.mxu0 %v103
  %140 = vmatprep.subr.bf16.mxu0 0
  %141 = vmatpush1.bf16.msra.mxu0 %v104
  %142 = vmatprep.subr.bf16.mxu0 0
  %143 = vmatpush1.bf16.msra.mxu0 %v105
  %144 = vmatprep.subr.bf16.mxu0 0
  %145 = vmatpush1.bf16.msra.mxu0 %v106
  %146 = vmatprep.subr.bf16.mxu0 0
  %147 = vmatpush1.bf16.msra.mxu0 %v107
  %148 = vmatprep.subr.bf16.mxu0 0
  %149 = vmatpush1.bf16.msra.mxu0 %v108
  %150 = vmatprep.subr.bf16.mxu0 0
  %151 = vmatpush1.bf16.msra.mxu0 %v109
  %152 = vmatprep.subr.bf16.mxu0 0
  %153 = vmatpush1.bf16.msra.mxu0 %v110
  %154 = vmatprep.subr.bf16.mxu0 0
  %155 = vmatpush1.bf16.msra.mxu0 %v111
  %156 = vmatprep.subr.bf16.mxu0 0
  %157 = vmatpush1.bf16.msra.mxu0 %v112
  %158 = vmatprep.subr.bf16.mxu0 0
  %159 = vmatpush1.bf16.msra.mxu0 %v132
  %160 = vmatprep.subr.bf16.mxu0 0
  %161 = vmatpush1.bf16.msra.mxu0 0
  %162 = vmatprep.subr.bf16.mxu0 0
  %163 = vmatpush1.bf16.msra.mxu0 0
  %164 = vmatprep.subr.bf16.mxu0 0
  %165 = vmatpush1.bf16.msra.mxu0 0
  %166 = vmatprep.mubr.bf16.mxu0 %v128
  %167 = vmatmul.mubr.bf16.gmra.mrb[0].mxu0 %v48
  %v168 = vpop.f32.mrb[0].mxu0
  %v169 = vadd.f32 0.0, %v168
  %v170 = vpop.f32.mrb[0].mxu0
  %v171 = vpop.f32.mrb[0].mxu0
  %v172 = vadd.f32 0.0, %v171
  %v173 = vpop.f32.mrb[0].mxu0
  %174 = vdwg.mxu0
  %s175 = scalar_lea.vmem %s0, 100
  %v176 = vld [vmem:[%s175] sm:$0xf]
  %v177 = vld [vmem:[%s175 + $0x4] sm:$0xf]
  %v178 = vld [vmem:[%s175 + $0x8] sm:$0xf]
  %v179 = vld [vmem:[%s175 + $0xc] sm:$0xf]
  %v180 = vld [vmem:[%s175 + $0x10] sm:$0xf]
  %v181 = vld [vmem:[%s175 + $0x14] sm:$0xf]
  %v182 = vld [vmem:[%s175 + $0x18] sm:$0xf]
  %v183 = vld [vmem:[%s175 + $0x1c] sm:$0xf]
  %v184 = vld [vmem:[%s175 + $0x20] sm:$0xf]
  %v185 = vld [vmem:[%s175 + $0x24] sm:$0xf]
  %v186 = vld [vmem:[%s175 + $0x28] sm:$0xf]
  %v187 = vld [vmem:[%s175 + $0x2c] sm:$0xf]
  %v188 = vld [vmem:[%s175 + $0x30] sm:$0xf]
  %v189 = vld [vmem:[%s175 + $0x34] sm:$0xf]
  %v190 = vld [vmem:[%s175 + $0x38] sm:$0xf]
  %v191 = vld [vmem:[%s175 + $0x3c] sm:$0xf]
  %v192 = vld [vmem:[%s175 + $0x40] sm:$0xf]
  %v193 = vld [vmem:[%s175 + $0x44] sm:$0xf]
  %v194 = vld [vmem:[%s175 + $0x48] sm:$0xf]
  %v195 = vld [vmem:[%s175 + $0x4c] sm:$0xf]
  %v196 = vld [vmem:[%s175 + $0x50] sm:$0xf]
  %v197 = vld [vmem:[%s175 + $0x54] sm:$0xf]
  %v198 = vld [vmem:[%s175 + $0x58] sm:$0xf]
  %v199 = vld [vmem:[%s175 + $0x5c] sm:$0xf]
  %v200 = vld [vmem:[%s175 + $0x60] sm:$0xf]
  %v226 = vunpack.c.l.b16 %v176
  %v227 = vunpack.c.l.b16 %v177
  %v228 = vunpack.c.l.b16 %v178
  %v229 = vunpack.c.l.b16 %v179
  %v230 = vunpack.c.l.b16 %v180
  %v231 = vunpack.c.l.b16 %v181
  %v232 = vunpack.c.l.b16 %v182
  %v233 = vunpack.c.l.b16 %v183
  %v234 = vunpack.c.l.b16 %v184
  %v235 = vunpack.c.l.b16 %v185
  %v236 = vunpack.c.l.b16 %v186
  %v237 = vunpack.c.l.b16 %v187
  %v238 = vunpack.c.l.b16 %v188
  %v239 = vunpack.c.l.b16 %v189
  %v240 = vunpack.c.l.b16 %v190
  %v241 = vunpack.c.l.b16 %v191
  %v242 = vunpack.c.l.b16 %v192
  %v243 = vunpack.c.l.b16 %v193
  %v244 = vunpack.c.l.b16 %v194
  %v245 = vunpack.c.l.b16 %v195
  %v246 = vunpack.c.l.b16 %v196
  %v247 = vunpack.c.l.b16 %v197
  %v248 = vunpack.c.l.b16 %v198
  %v249 = vunpack.c.l.b16 %v199
  %v250 = vunpack.c.l.b16 %v200
  %v251 = vpack.c.b16 %v227, %v226
  %v252 = vpack.c.b16 %v229, %v228
  %v253 = vpack.c.b16 %v231, %v230
  %v254 = vpack.c.b16 %v233, %v232
  %v255 = vpack.c.b16 %v235, %v234
  %v256 = vpack.c.b16 %v237, %v236
  %v257 = vpack.c.b16 %v239, %v238
  %v258 = vpack.c.b16 %v241, %v240
  %v259 = vpack.c.b16 %v243, %v242
  %v260 = vpack.c.b16 %v245, %v244
  %v261 = vpack.c.b16 %v247, %v246
  %v262 = vpack.c.b16 %v249, %v248
  %v263 = vpack.c.b16 %v250, %v250
  %v277 = vsel %vm130, %v263, 0
  %279 = vmatprep.subr.bf16.mxu0 0
  %280 = vmatpush1.bf16.msra.mxu0 %v251
  %281 = vmatprep.subr.bf16.mxu0 0
  %282 = vmatpush1.bf16.msra.mxu0 %v252
  %283 = vmatprep.subr.bf16.mxu0 0
  %284 = vmatpush1.bf16.msra.mxu0 %v253
  %285 = vmatprep.subr.bf16.mxu0 0
  %286 = vmatpush1.bf16.msra.mxu0 %v254
  %287 = vmatprep.subr.bf16.mxu0 0
  %288 = vmatpush1.bf16.msra.mxu0 %v255
  %289 = vmatprep.subr.bf16.mxu0 0
  %290 = vmatpush1.bf16.msra.mxu0 %v256
  %291 = vmatprep.subr.bf16.mxu0 0
  %292 = vmatpush1.bf16.msra.mxu0 %v257
  %293 = vmatprep.subr.bf16.mxu0 0
  %294 = vmatpush1.bf16.msra.mxu0 %v258
  %295 = vmatprep.subr.bf16.mxu0 0
  %296 = vmatpush1.bf16.msra.mxu0 %v259
  %297 = vmatprep.subr.bf16.mxu0 0
  %298 = vmatpush1.bf16.msra.mxu0 %v260
  %299 = vmatprep.subr.bf16.mxu0 0
  %300 = vmatpush1.bf16.msra.mxu0 %v261
  %301 = vmatprep.subr.bf16.mxu0 0
  %302 = vmatpush1.bf16.msra.mxu0 %v262
  %303 = vmatprep.subr.bf16.mxu0 0
  %304 = vmatpush1.bf16.msra.mxu0 %v277
  %305 = vmatprep.subr.bf16.mxu0 0
  %306 = vmatpush1.bf16.msra.mxu0 0
  %307 = vmatprep.subr.bf16.mxu0 0
  %308 = vmatpush1.bf16.msra.mxu0 0
  %309 = vmatprep.subr.bf16.mxu0 0
  %310 = vmatpush1.bf16.msra.mxu0 0
  %311 = vmatprep.mubr.bf16.mxu0 %v128
  %312 = vmatmul.mubr.bf16.gmra.mrb[0].mxu0 %v48
  %v313 = vpop.f32.mrb[0].mxu0
  %v314 = vadd.f32 0.0, %v313
  %v315 = vpop.f32.mrb[0].mxu0
  %v316 = vpop.f32.mrb[0].mxu0
  %v317 = vadd.f32 0.0, %v316
  %v318 = vpop.f32.mrb[0].mxu0
  %319 = vdwg.mxu0
  %v320 = vmax.f32 %v169, %v314
  %v321 = vmax.f32 %v172, %v317
  %s322 = scalar_lea.vmem %s0, 200
  %v323 = vld [vmem:[%s322] sm:$0xf]
  %v324 = vld [vmem:[%s322 + $0x4] sm:$0xf]
  %v325 = vld [vmem:[%s322 + $0x8] sm:$0xf]
  %v326 = vld [vmem:[%s322 + $0xc] sm:$0xf]
  %v327 = vld [vmem:[%s322 + $0x10] sm:$0xf]
  %v328 = vld [vmem:[%s322 + $0x14] sm:$0xf]
  %v329 = vld [vmem:[%s322 + $0x18] sm:$0xf]
  %v330 = vld [vmem:[%s322 + $0x1c] sm:$0xf]
  %v331 = vld [vmem:[%s322 + $0x20] sm:$0xf]
  %v332 = vld [vmem:[%s322 + $0x24] sm:$0xf]
  %v333 = vld [vmem:[%s322 + $0x28] sm:$0xf]
  %v334 = vld [vmem:[%s322 + $0x2c] sm:$0xf]
  %v335 = vld [vmem:[%s322 + $0x30] sm:$0xf]
  %v336 = vld [vmem:[%s322 + $0x34] sm:$0xf]
  %v337 = vld [vmem:[%s322 + $0x38] sm:$0xf]
  %v338 = vld [vmem:[%s322 + $0x3c] sm:$0xf]
  %v339 = vld [vmem:[%s322 + $0x40] sm:$0xf]
  %v340 = vld [vmem:[%s322 + $0x44] sm:$0xf]
  %v341 = vld [vmem:[%s322 + $0x48] sm:$0xf]
  %v342 = vld [vmem:[%s322 + $0x4c] sm:$0xf]
  %v343 = vld [vmem:[%s322 + $0x50] sm:$0xf]
  %v344 = vld [vmem:[%s322 + $0x54] sm:$0xf]
  %v345 = vld [vmem:[%s322 + $0x58] sm:$0xf]
  %v346 = vld [vmem:[%s322 + $0x5c] sm:$0xf]
  %v347 = vld [vmem:[%s322 + $0x60] sm:$0xf]
  %v373 = vunpack.c.l.b16 %v323
  %v374 = vunpack.c.l.b16 %v324
  %v375 = vunpack.c.l.b16 %v325
  %v376 = vunpack.c.l.b16 %v326
  %v377 = vunpack.c.l.b16 %v327
  %v378 = vunpack.c.l.b16 %v328
  %v379 = vunpack.c.l.b16 %v329
  %v380 = vunpack.c.l.b16 %v330
  %v381 = vunpack.c.l.b16 %v331
  %v382 = vunpack.c.l.b16 %v332
  %v383 = vunpack.c.l.b16 %v333
  %v384 = vunpack.c.l.b16 %v334
  %v385 = vunpack.c.l.b16 %v335
  %v386 = vunpack.c.l.b16 %v336
  %v387 = vunpack.c.l.b16 %v337
  %v388 = vunpack.c.l.b16 %v338
  %v389 = vunpack.c.l.b16 %v339
  %v390 = vunpack.c.l.b16 %v340
  %v391 = vunpack.c.l.b16 %v341
  %v392 = vunpack.c.l.b16 %v342
  %v393 = vunpack.c.l.b16 %v343
  %v394 = vunpack.c.l.b16 %v344
  %v395 = vunpack.c.l.b16 %v345
  %v396 = vunpack.c.l.b16 %v346
  %v397 = vunpack.c.l.b16 %v347
  %v398 = vpack.c.b16 %v374, %v373
  %v399 = vpack.c.b16 %v376, %v375
  %v400 = vpack.c.b16 %v378, %v377
  %v401 = vpack.c.b16 %v380, %v379
  %v402 = vpack.c.b16 %v382, %v381
  %v403 = vpack.c.b16 %v384, %v383
  %v404 = vpack.c.b16 %v386, %v385
  %v405 = vpack.c.b16 %v388, %v387
  %v406 = vpack.c.b16 %v390, %v389
  %v407 = vpack.c.b16 %v392, %v391
  %v408 = vpack.c.b16 %v394, %v393
  %v409 = vpack.c.b16 %v396, %v395
  %v410 = vpack.c.b16 %v397, %v397
  %v424 = vsel %vm130, %v410, 0
  %426 = vmatprep.subr.bf16.mxu0 0
  %427 = vmatpush1.bf16.msra.mxu0 %v398
  %428 = vmatprep.subr.bf16.mxu0 0
  %429 = vmatpush1.bf16.msra.mxu0 %v399
  %430 = vmatprep.subr.bf16.mxu0 0
  %431 = vmatpush1.bf16.msra.mxu0 %v400
  %432 = vmatprep.subr.bf16.mxu0 0
  %433 = vmatpush1.bf16.msra.mxu0 %v401
  %434 = vmatprep.subr.bf16.mxu0 0
  %435 = vmatpush1.bf16.msra.mxu0 %v402
  %436 = vmatprep.subr.bf16.mxu0 0
  %437 = vmatpush1.bf16.msra.mxu0 %v403
  %438 = vmatprep.subr.bf16.mxu0 0
  %439 = vmatpush1.bf16.msra.mxu0 %v404
  %440 = vmatprep.subr.bf16.mxu0 0
  %441 = vmatpush1.bf16.msra.mxu0 %v405
  %442 = vmatprep.subr.bf16.mxu0 0
  %443 = vmatpush1.bf16.msra.mxu0 %v406
  %444 = vmatprep.subr.bf16.mxu0 0
  %445 = vmatpush1.bf16.msra.mxu0 %v407
  %446 = vmatprep.subr.bf16.mxu0 0
  %447 = vmatpush1.bf16.msra.mxu0 %v408
  %448 = vmatprep.subr.bf16.mxu0 0
  %449 = vmatpush1.bf16.msra.mxu0 %v409
  %450 = vmatprep.subr.bf16.mxu0 0
  %451 = vmatpush1.bf16.msra.mxu0 %v424
  %452 = vmatprep.subr.bf16.mxu0 0
  %453 = vmatpush1.bf16.msra.mxu0 0
  %454 = vmatprep.subr.bf16.mxu0 0
  %455 = vmatpush1.bf16.msra.mxu0 0
  %456 = vmatprep.subr.bf16.mxu0 0
  %457 = vmatpush1.bf16.msra.mxu0 0
  %458 = vmatprep.mubr.bf16.mxu0 %v128
  %459 = vmatmul.mubr.bf16.gmra.mrb[0].mxu0 %v48
  %v460 = vpop.f32.mrb[0].mxu0
  %v461 = vadd.f32 0.0, %v460
  %v462 = vpop.f32.mrb[0].mxu0
  %v463 = vpop.f32.mrb[0].mxu0
  %v464 = vadd.f32 0.0, %v463
  %v465 = vpop.f32.mrb[0].mxu0
  %466 = vdwg.mxu0
  %v467 = vmax.f32 %v320, %v461
  %v468 = vmax.f32 %v321, %v464
  %s469 = scalar_lea.vmem %s0, 300
  %v470 = vld [vmem:[%s469] sm:$0xf]
  %v471 = vld [vmem:[%s469 + $0x4] sm:$0xf]
  %v472 = vld [vmem:[%s469 + $0x8] sm:$0xf]
  %v473 = vld [vmem:[%s469 + $0xc] sm:$0xf]
  %v474 = vld [vmem:[%s469 + $0x10] sm:$0xf]
  %v475 = vld [vmem:[%s469 + $0x14] sm:$0xf]
  %v476 = vld [vmem:[%s469 + $0x18] sm:$0xf]
  %v477 = vld [vmem:[%s469 + $0x1c] sm:$0xf]
  %v478 = vld [vmem:[%s469 + $0x20] sm:$0xf]
  %v479 = vld [vmem:[%s469 + $0x24] sm:$0xf]
  %v480 = vld [vmem:[%s469 + $0x28] sm:$0xf]
  %v481 = vld [vmem:[%s469 + $0x2c] sm:$0xf]
  %v482 = vld [vmem:[%s469 + $0x30] sm:$0xf]
  %v483 = vld [vmem:[%s469 + $0x34] sm:$0xf]
  %v484 = vld [vmem:[%s469 + $0x38] sm:$0xf]
  %v485 = vld [vmem:[%s469 + $0x3c] sm:$0xf]
  %v486 = vld [vmem:[%s469 + $0x40] sm:$0xf]
  %v487 = vld [vmem:[%s469 + $0x44] sm:$0xf]
  %v488 = vld [vmem:[%s469 + $0x48] sm:$0xf]
  %v489 = vld [vmem:[%s469 + $0x4c] sm:$0xf]
  %v490 = vld [vmem:[%s469 + $0x50] sm:$0xf]
  %v491 = vld [vmem:[%s469 + $0x54] sm:$0xf]
  %v492 = vld [vmem:[%s469 + $0x58] sm:$0xf]
  %v493 = vld [vmem:[%s469 + $0x5c] sm:$0xf]
  %v494 = vld [vmem:[%s469 + $0x60] sm:$0xf]
  %v520 = vunpack.c.l.b16 %v470
  %v521 = vunpack.c.l.b16 %v471
  %v522 = vunpack.c.l.b16 %v472
  %v523 = vunpack.c.l.b16 %v473
  %v524 = vunpack.c.l.b16 %v474
  %v525 = vunpack.c.l.b16 %v475
  %v526 = vunpack.c.l.b16 %v476
  %v527 = vunpack.c.l.b16 %v477
  %v528 = vunpack.c.l.b16 %v478
  %v529 = vunpack.c.l.b16 %v479
  %v530 = vunpack.c.l.b16 %v480
  %v531 = vunpack.c.l.b16 %v481
  %v532 = vunpack.c.l.b16 %v482
  %v533 = vunpack.c.l.b16 %v483
  %v534 = vunpack.c.l.b16 %v484
  %v535 = vunpack.c.l.b16 %v485
  %v536 = vunpack.c.l.b16 %v486
  %v537 = vunpack.c.l.b16 %v487
  %v538 = vunpack.c.l.b16 %v488
  %v539 = vunpack.c.l.b16 %v489
  %v540 = vunpack.c.l.b16 %v490
  %v541 = vunpack.c.l.b16 %v491
  %v542 = vunpack.c.l.b16 %v492
  %v543 = vunpack.c.l.b16 %v493
  %v544 = vunpack.c.l.b16 %v494
  %v545 = vpack.c.b16 %v521, %v520
  %v546 = vpack.c.b16 %v523, %v522
  %v547 = vpack.c.b16 %v525, %v524
  %v548 = vpack.c.b16 %v527, %v526
  %v549 = vpack.c.b16 %v529, %v528
  %v550 = vpack.c.b16 %v531, %v530
  %v551 = vpack.c.b16 %v533, %v532
  %v552 = vpack.c.b16 %v535, %v534
  %v553 = vpack.c.b16 %v537, %v536
  %v554 = vpack.c.b16 %v539, %v538
  %v555 = vpack.c.b16 %v541, %v540
  %v556 = vpack.c.b16 %v543, %v542
  %v557 = vpack.c.b16 %v544, %v544
  %v571 = vsel %vm130, %v557, 0
  %573 = vmatprep.subr.bf16.mxu0 0
  %574 = vmatpush1.bf16.msra.mxu0 %v545
  %575 = vmatprep.subr.bf16.mxu0 0
  %576 = vmatpush1.bf16.msra.mxu0 %v546
  %577 = vmatprep.subr.bf16.mxu0 0
  %578 = vmatpush1.bf16.msra.mxu0 %v547
  %579 = vmatprep.subr.bf16.mxu0 0
  %580 = vmatpush1.bf16.msra.mxu0 %v548
  %581 = vmatprep.subr.bf16.mxu0 0
  %582 = vmatpush1.bf16.msra.mxu0 %v549
  %583 = vmatprep.subr.bf16.mxu0 0
  %584 = vmatpush1.bf16.msra.mxu0 %v550
  %585 = vmatprep.subr.bf16.mxu0 0
  %586 = vmatpush1.bf16.msra.mxu0 %v551
  %587 = vmatprep.subr.bf16.mxu0 0
  %588 = vmatpush1.bf16.msra.mxu0 %v552
  %589 = vmatprep.subr.bf16.mxu0 0
  %590 = vmatpush1.bf16.msra.mxu0 %v553
  %591 = vmatprep.subr.bf16.mxu0 0
  %592 = vmatpush1.bf16.msra.mxu0 %v554
  %593 = vmatprep.subr.bf16.mxu0 0
  %594 = vmatpush1.bf16.msra.mxu0 %v555
  %595 = vmatprep.subr.bf16.mxu0 0
  %596 = vmatpush1.bf16.msra.mxu0 %v556
  %597 = vmatprep.subr.bf16.mxu0 0
  %598 = vmatpush1.bf16.msra.mxu0 %v571
  %599 = vmatprep.subr.bf16.mxu0 0
  %600 = vmatpush1.bf16.msra.mxu0 0
  %601 = vmatprep.subr.bf16.mxu0 0
  %602 = vmatpush1.bf16.msra.mxu0 0
  %603 = vmatprep.subr.bf16.mxu0 0
  %604 = vmatpush1.bf16.msra.mxu0 0
  %605 = vmatprep.mubr.bf16.mxu0 %v128
  %606 = vmatmul.mubr.bf16.gmra.mrb[0].mxu0 %v48
  %v607 = vpop.f32.mrb[0].mxu0
  %v608 = vadd.f32 0.0, %v607
  %v609 = vpop.f32.mrb[0].mxu0
  %v610 = vpop.f32.mrb[0].mxu0
  %v611 = vadd.f32 0.0, %v610
  %v612 = vpop.f32.mrb[0].mxu0
  %613 = vdwg.mxu0
  %v614 = vmax.f32 %v467, %v608
  %v615 = vmax.f32 %v468, %v611
  %v616 = vld [vmem:[%s2] sm:$0xff]
  %v617 = vld [vmem:[%s2 + $0x8] sm:$0xff]
  %619 = vset.pattern.permute.xlu0 0
  %620 = vperm.xlu0 %619, %v616
  %v621 = vpop.permute.xlu0 %620
  %624 = vset.pattern.permute.xlu0 0
  %625 = vperm.xlu0 %624, %v617
  %v626 = vpop.permute.xlu0 %625
  %v628 = vadd.f32 %v614, %v621
  %v629 = vadd.f32 %v615, %v626
  %v630 = vmax.f32 %v628, 0.0
  %v631 = vmax.f32 %v629, 0.0
  %vm632 = vcmask 408576
  %633 = vst.msk [vmem:[%s3] sm:$0xff] %vm632, %v630
  %634 = vst.msk [vmem:[%s3 + $0x8] sm:$0xff] %vm632, %v631
  // Predicated region
  $region14: #{cnn_cifar_forward.4} parent=0 // pred_check
    _
  $region15: #{cnn_cifar_forward.4} parent=0 // pred_check_branch
    %636 = sbr.rel (0) target = $region17
  $region16: #{cnn_cifar_forward.4} parent=0 // pred_region
    _
  $region17: #{cnn_cifar_forward.4} parent=0 // pred_fallthru
    _
  // Predicated region
  $region18: #{cnn_cifar_forward.4} parent=0 // pred_check
    _
  $region19: #{cnn_cifar_forward.4} parent=0 // pred_check_branch
    %638 = sbr.rel (0) target = $region21
  $region20: #{cnn_cifar_forward.4} parent=0 // pred_region
    _
  $region21: #{cnn_cifar_forward.4} parent=0 // pred_fallthru
    _

// kernel: cnn_cifar_forward.5
$region0: #{cnn_cifar_forward.5}
  #allocation0 [shape = 'u32[]', space=smem, size = 0x4, offset = 0x4, fixed_abs, tag = 'smem constant byte address 0x4 - core index']
  #allocation1 [shape = 'u32[144,128]{1,0:T(1,128)}', space=vmem, size = 0x12000, scoped, tag = 'internal scratch']
  %s0 = inlined_call_operand.vmem [shape: f32[2,400], index: 0, kind: input, shape index: {}]
  %s1 = inlined_call_operand.vmem [shape: f32[400,128], index: 1, kind: input, shape index: {}]
  %s2 = inlined_call_operand.vmem [shape: f32[1,128], index: 2, kind: input, shape index: {}]
  %s3 = inlined_call_operand.vmem [shape: f32[128,128], index: 3, kind: input, shape index: {}]
  %s4 = inlined_call_operand.vmem [shape: f32[1,128], index: 4, kind: input, shape index: {}]
  %s5 = inlined_call_operand.vmem [shape: f32[128,128], index: 5, kind: input, shape index: {}]
  %s6 = inlined_call_operand.vmem [shape: f32[1,128], index: 6, kind: input, shape index: {}]
  %s7 = inlined_call_operand.hbm [shape: f32[2,128], index: 7, kind: output, shape index: {0}]
  %s8 = inlined_call_operand.hbm [shape: f32[2,128], index: 8, kind: output, shape index: {1}]
  %9 = xla_tuple %s7, %s8
  %s10 = sld [smem:[#allocation0]]
  $region46: #{cnn_cifar_forward.5} parent=0
    _
  %s12 = ssub.s32 1, %s10
  %s13 = scalar_select 0, %s12, %s10
  $region1: #{cnn_cifar_forward.5} parent=0
    #allocation2 [shape = 'u8[1024]{0}', space=vmem, size = 0x400, scoped, tag = 'output window, operand 0, single buffered']
    #allocation3 [shape = 's32[1]{0}', space=sflag, size = 0x4, scoped, tag = 'scoped memory for cnn_cifar_forward.5']
    #allocation4 [shape = 'u8[1024]{0}', space=vmem, size = 0x400, scoped, tag = 'output window, operand 1, single buffered']
    #allocation5 [shape = 's32[1]{0}', space=sflag, size = 0x4, scoped, tag = 'scoped memory for cnn_cifar_forward.5']
    %14 = vsyncpa [#allocation3], 0
    %15 = vsyncpa [#allocation5], 0
    // Predicated region
    $region2: #{cnn_cifar_forward.5} parent=1 // pred_check
      _
    $region3: #{cnn_cifar_forward.5} parent=1 // pred_check_branch
      %17 = sbr.rel (0) target = $region5
    $region4: #{cnn_cifar_forward.5} parent=1 // pred_region
      _
    $region5: #{cnn_cifar_forward.5} parent=1 // pred_fallthru
      _
    // Predicated region
    $region6: #{cnn_cifar_forward.5} parent=1 // pred_check
      _
    $region7: #{cnn_cifar_forward.5} parent=1 // pred_check_branch
      %19 = sbr.rel (0) target = $region9
    $region8: #{cnn_cifar_forward.5} parent=1 // pred_region
      _
    $region9: #{cnn_cifar_forward.5} parent=1 // pred_fallthru
      _
    // Predicated region
    $region10: #{cnn_cifar_forward.5} parent=1 // pred_check
      _
    $region11: #{cnn_cifar_forward.5} parent=1 // pred_check_branch
      %21 = sbr.rel (0) target = $region13
    $region12: #{cnn_cifar_forward.5} parent=1 // pred_region
      _
    $region13: #{cnn_cifar_forward.5} parent=1 // pred_fallthru
      _
    // Predicated region
    $region14: #{cnn_cifar_forward.5} parent=1 // pred_check
      _
    $region15: #{cnn_cifar_forward.5} parent=1 // pred_check_branch
      %23 = sbr.rel (0) target = $region17
    $region16: #{cnn_cifar_forward.5} parent=1 // pred_region
      _
    $region17: #{cnn_cifar_forward.5} parent=1 // pred_fallthru
      _
    // Predicated region
    $region18: #{cnn_cifar_forward.5} parent=1 // pred_check
      _
    $region19: #{cnn_cifar_forward.5} parent=1 // pred_check_branch
      %25 = sbr.rel (0) target = $region21
    $region20: #{cnn_cifar_forward.5} parent=1 // pred_region
      _
    $region21: #{cnn_cifar_forward.5} parent=1 // pred_fallthru
      _
    // Predicated region
    $region22: #{cnn_cifar_forward.5} parent=1 // pred_check
      _
    $region23: #{cnn_cifar_forward.5} parent=1 // pred_check_branch
      %27 = sbr.rel (0) target = $region25
    $region24: #{cnn_cifar_forward.5} parent=1 // pred_region
      _
    $region25: #{cnn_cifar_forward.5} parent=1 // pred_fallthru
      _
    // Predicated region
    $region26: #{cnn_cifar_forward.5} parent=1 // pred_check
      _
    $region27: #{cnn_cifar_forward.5} parent=1 // pred_check_branch
      %29 = sbr.rel (0) target = $region29
    $region28: #{cnn_cifar_forward.5} parent=1 // pred_region
      _
    $region29: #{cnn_cifar_forward.5} parent=1 // pred_fallthru
      _
    %v30 = vld [vmem:[%s0] sm:$0xff]
    %v31 = vld [vmem:[%s1] sm:$0xff]
    %v32 = vld [vmem:[%s1 + $0x8] sm:$0xff]
    %v33 = vld [vmem:[%s1 + $0x10] sm:$0xff]
    %v34 = vld [vmem:[%s1 + $0x18] sm:$0xff]
    %v35 = vld [vmem:[%s1 + $0x20] sm:$0xff]
    %v36 = vld [vmem:[%s1 + $0x28] sm:$0xff]
    %v37 = vld [vmem:[%s1 + $0x30] sm:$0xff]
    %v38 = vld [vmem:[%s1 + $0x38] sm:$0xff]
    %v39 = vld [vmem:[%s1 + $0x40] sm:$0xff]
    %v40 = vld [vmem:[%s1 + $0x48] sm:$0xff]
    %v41 = vld [vmem:[%s1 + $0x50] sm:$0xff]
    %v42 = vld [vmem:[%s1 + $0x58] sm:$0xff]
    %v43 = vld [vmem:[%s1 + $0x60] sm:$0xff]
    %v44 = vld [vmem:[%s1 + $0x68] sm:$0xff]
    %v45 = vld [vmem:[%s1 + $0x70] sm:$0xff]
    %v46 = vld [vmem:[%s1 + $0x78] sm:$0xff]
    %v47 = vld [vmem:[%s1 + $0x80] sm:$0xff]
    %v48 = vld [vmem:[%s1 + $0x88] sm:$0xff]
    %v49 = vld [vmem:[%s1 + $0x90] sm:$0xff]
    %v50 = vld [vmem:[%s1 + $0x98] sm:$0xff]
    %v51 = vld [vmem:[%s1 + $0xa0] sm:$0xff]
    %v52 = vld [vmem:[%s1 + $0xa8] sm:$0xff]
    %v53 = vld [vmem:[%s1 + $0xb0] sm:$0xff]
    %v54 = vld [vmem:[%s1 + $0xb8] sm:$0xff]
    %v55 = vld [vmem:[%s1 + $0xc0] sm:$0xff]
    %v56 = vld [vmem:[%s1 + $0xc8] sm:$0xff]
    %v57 = vld [vmem:[%s1 + $0xd0] sm:$0xff]
    %v58 = vld [vmem:[%s1 + $0xd8] sm:$0xff]
    %v59 = vld [vmem:[%s1 + $0xe0] sm:$0xff]
    %v60 = vld [vmem:[%s1 + $0xe8] sm:$0xff]
    %v61 = vld [vmem:[%s1 + $0xf0] sm:$0xff]
    %v62 = vld [vmem:[%s1 + $0xf8] sm:$0xff]
    %v63 = vld [vmem:[%s1 + $0x100] sm:$0xff]
    %v64 = vld [vmem:[%s1 + $0x108] sm:$0xff]
    %v65 = vld [vmem:[%s1 + $0x110] sm:$0xff]
    %v66 = vld [vmem:[%s1 + $0x118] sm:$0xff]
    %v67 = vld [vmem:[%s1 + $0x120] sm:$0xff]
    %v68 = vld [vmem:[%s1 + $0x128] sm:$0xff]
    %v69 = vld [vmem:[%s1 + $0x130] sm:$0xff]
    %v70 = vld [vmem:[%s1 + $0x138] sm:$0xff]
    %v71 = vld [vmem:[%s1 + $0x140] sm:$0xff]
    %v72 = vld [vmem:[%s1 + $0x148] sm:$0xff]
    %v73 = vld [vmem:[%s1 + $0x150] sm:$0xff]
    %v74 = vld [vmem:[%s1 + $0x158] sm:$0xff]
    %v75 = vld [vmem:[%s1 + $0x160] sm:$0xff]
    %v76 = vld [vmem:[%s1 + $0x168] sm:$0xff]
    %v77 = vld [vmem:[%s1 + $0x170] sm:$0xff]
    %v78 = vld [vmem:[%s1 + $0x178] sm:$0xff]
    %v79 = vld [vmem:[%s1 + $0x180] sm:$0xff]
    %v80 = vld [vmem:[%s1 + $0x188] sm:$0xff]
    %v81 = vld [vmem:[%s2] sm:$0x1]
    %v83 = vlaneseq
    %v84 = vshrl.u32 %v83, 7
    %v85 = vsub.s32 0, %v84
    %v86 = vrot.slane %v81, %v85
    %v89 = vcombine.high %v30, %v30
    %v91 = vunpack.c.l.s4 1983009808
    %v92 = vunpack.c.0.s8 %v91
    %v93 = vlaneseq
    %v94 = vshrl.u32 %v93, 7
    %v95 = vsub.s32 %v92, %v94
    %v96 = vrot.slane %v30, %v95
    %v98 = vunpack.c.l.s4 1983009808
    %v99 = vunpack.c.0.s8 %v98
    %v100 = vlaneseq
    %v101 = vshrl.u32 %v100, 7
    %v102 = vsub.s32 %v99, %v101
    %v103 = vrot.slane %v89, %v102
    %v104 = vcombine.high %v96, %v96
    %v105 = vcombine.high %v103, %v103
    %vm109 = vcmask 130048
    %v110 = vsel %vm109, %v105, 0
    %112 = vmatprep.subr.mxu0 0.0
    %113 = vmatpush1.msra.mxu0 %v31
    %114 = vmatprep.subr.mxu0 0.0
    %115 = vmatpush1.msra.mxu0 %v32
    %116 = vmatprep.subr.mxu0 0.0
    %117 = vmatpush1.msra.mxu0 %v33
    %118 = vmatprep.subr.mxu0 0.0
    %119 = vmatpush1.msra.mxu0 %v34
    %120 = vmatprep.subr.mxu0 0.0
    %121 = vmatpush1.msra.mxu0 %v35
    %122 = vmatprep.subr.mxu0 0.0
    %123 = vmatpush1.msra.mxu0 %v36
    %124 = vmatprep.subr.mxu0 0.0
    %125 = vmatpush1.msra.mxu0 %v37
    %126 = vmatprep.subr.mxu0 0.0
    %127 = vmatpush1.msra.mxu0 %v38
    %128 = vmatprep.subr.mxu0 0.0
    %129 = vmatpush1.msra.mxu0 %v39
    %130 = vmatprep.subr.mxu0 0.0
    %131 = vmatpush1.msra.mxu0 %v40
    %132 = vmatprep.subr.mxu0 0.0
    %133 = vmatpush1.msra.mxu0 %v41
    %134 = vmatprep.subr.mxu0 0.0
    %135 = vmatpush1.msra.mxu0 %v42
    %136 = vmatprep.subr.mxu0 0.0
    %137 = vmatpush1.msra.mxu0 %v43
    %138 = vmatprep.subr.mxu0 0.0
    %139 = vmatpush1.msra.mxu0 %v44
    %140 = vmatprep.subr.mxu0 0.0
    %141 = vmatpush1.msra.mxu0 %v45
    %142 = vmatprep.subr.mxu0 0.0
    %143 = vmatpush1.msra.mxu0 %v46
    %144 = vmatprep.subr.mxu0 0.0
    %145 = vmatpush1.msra.mxu0 %v47
    %146 = vmatprep.subr.mxu0 0.0
    %147 = vmatpush1.msra.mxu0 %v48
    %148 = vmatprep.subr.mxu0 0.0
    %149 = vmatpush1.msra.mxu0 %v49
    %150 = vmatprep.subr.mxu0 0.0
    %151 = vmatpush1.msra.mxu0 %v50
    %152 = vmatprep.subr.mxu0 0.0
    %153 = vmatpush1.msra.mxu0 %v51
    %154 = vmatprep.subr.mxu0 0.0
    %155 = vmatpush1.msra.mxu0 %v52
    %156 = vmatprep.subr.mxu0 0.0
    %157 = vmatpush1.msra.mxu0 %v53
    %158 = vmatprep.subr.mxu0 0.0
    %159 = vmatpush1.msra.mxu0 %v54
    %160 = vmatprep.subr.mxu0 0.0
    %161 = vmatpush1.msra.mxu0 %v55
    %162 = vmatprep.subr.mxu0 0.0
    %163 = vmatpush1.msra.mxu0 %v56
    %164 = vmatprep.subr.mxu0 0.0
    %165 = vmatpush1.msra.mxu0 %v57
    %166 = vmatprep.subr.mxu0 0.0
    %167 = vmatpush1.msra.mxu0 %v58
    %168 = vmatprep.subr.mxu0 0.0
    %169 = vmatpush1.msra.mxu0 %v59
    %170 = vmatprep.subr.mxu0 0.0
    %171 = vmatpush1.msra.mxu0 %v60
    %172 = vmatprep.subr.mxu0 0.0
    %173 = vmatpush1.msra.mxu0 %v61
    %174 = vmatprep.subr.mxu0 0.0
    %175 = vmatpush1.msra.mxu0 %v62
    %176 = vmatprep.mubr.f32.mxu0 %v104
    %177 = vmatmul.mubr.f32.gmra.mrb[0].mxu0 %v96
    %v178 = vpop.f32.mrb[0].mxu0
    %v179 = vadd.f32 %v86, %v178
    %v180 = vpop.f32.mrb[0].mxu0
    %181 = vdwg.mxu0
    %182 = vmatprep.subr.mxu0 0.0
    %183 = vmatpush1.msra.mxu0 %v63
    %184 = vmatprep.subr.mxu0 0.0
    %185 = vmatpush1.msra.mxu0 %v64
    %186 = vmatprep.subr.mxu0 0.0
    %187 = vmatpush1.msra.mxu0 %v65
    %188 = vmatprep.subr.mxu0 0.0
    %189 = vmatpush1.msra.mxu0 %v66
    %190 = vmatprep.subr.mxu0 0.0
    %191 = vmatpush1.msra.mxu0 %v67
    %192 = vmatprep.subr.mxu0 0.0
    %193 = vmatpush1.msra.mxu0 %v68
    %194 = vmatprep.subr.mxu0 0.0
    %195 = vmatpush1.msra.mxu0 %v69
    %196 = vmatprep.subr.mxu0 0.0
    %197 = vmatpush1.msra.mxu0 %v70
    %198 = vmatprep.subr.mxu0 0.0
    %199 = vmatpush1.msra.mxu0 %v71
    %200 = vmatprep.subr.mxu0 0.0
    %201 = vmatpush1.msra.mxu0 %v72
    %202 = vmatprep.subr.mxu0 0.0
    %203 = vmatpush1.msra.mxu0 %v73
    %204 = vmatprep.subr.mxu0 0.0
    %205 = vmatpush1.msra.mxu0 %v74
    %206 = vmatprep.subr.mxu0 0.0
    %207 = vmatpush1.msra.mxu0 %v75
    %208 = vmatprep.subr.mxu0 0.0
    %209 = vmatpush1.msra.mxu0 %v76
    %210 = vmatprep.subr.mxu0 0.0
    %211 = vmatpush1.msra.mxu0 %v77
    %212 = vmatprep.subr.mxu0 0.0
    %213 = vmatpush1.msra.mxu0 %v78
    %214 = vmatprep.subr.mxu0 0.0
    %215 = vmatpush1.msra.mxu0 %v79
    %216 = vmatprep.subr.mxu0 0.0
    %217 = vmatpush1.msra.mxu0 %v80
    %218 = vmatprep.subr.mxu0 0.0
    %219 = vmatpush1.msra.mxu0 0.0
    %220 = vmatprep.subr.mxu0 0.0
    %221 = vmatpush1.msra.mxu0 0.0
    %222 = vmatprep.subr.mxu0 0.0
    %223 = vmatpush1.msra.mxu0 0.0
    %224 = vmatprep.subr.mxu0 0.0
    %225 = vmatpush1.msra.mxu0 0.0
    %226 = vmatprep.subr.mxu0 0.0
    %227 = vmatpush1.msra.mxu0 0.0
    %228 = vmatprep.subr.mxu0 0.0
    %229 = vmatpush1.msra.mxu0 0.0
    %230 = vmatprep.subr.mxu0 0.0
    %231 = vmatpush1.msra.mxu0 0.0
    %232 = vmatprep.subr.mxu0 0.0
    %233 = vmatpush1.msra.mxu0 0.0
    %234 = vmatprep.subr.mxu0 0.0
    %235 = vmatpush1.msra.mxu0 0.0
    %236 = vmatprep.subr.mxu0 0.0
    %237 = vmatpush1.msra.mxu0 0.0
    %238 = vmatprep.subr.mxu0 0.0
    %239 = vmatpush1.msra.mxu0 0.0
    %240 = vmatprep.subr.mxu0 0.0
    %241 = vmatpush1.msra.mxu0 0.0
    %242 = vmatprep.subr.mxu0 0.0
    %243 = vmatpush1.msra.mxu0 0.0
    %244 = vmatprep.subr.mxu0 0.0
    %245 = vmatpush1.msra.mxu0 0.0
    %246 = vmatprep.mubr.f32.mxu0 %v110
    %247 = vmatmul.mubr.f32.gmra.mrb[0].mxu0 %v103
    %v248 = vpop.f32.mrb[0].mxu0
    %v249 = vadd.f32 %v179, %v248
    %v250 = vpop.f32.mrb[0].mxu0
    %251 = vdwg.mxu0
    %v252 = vmax.f32 %v249, 0.0
    %v253 = vld [vmem:[%s3] sm:$0xff]
    %v254 = vld [vmem:[%s3 + $0x8] sm:$0xff]
    %v255 = vld [vmem:[%s3 + $0x10] sm:$0xff]
    %v256 = vld [vmem:[%s3 + $0x18] sm:$0xff]
    %v257 = vld [vmem:[%s3 + $0x20] sm:$0xff]
    %v258 = vld [vmem:[%s3 + $0x28] sm:$0xff]
    %v259 = vld [vmem:[%s3 + $0x30] sm:$0xff]
    %v260 = vld [vmem:[%s3 + $0x38] sm:$0xff]
    %v261 = vld [vmem:[%s3 + $0x40] sm:$0xff]
    %v262 = vld [vmem:[%s3 + $0x48] sm:$0xff]
    %v263 = vld [vmem:[%s3 + $0x50] sm:$0xff]
    %v264 = vld [vmem:[%s3 + $0x58] sm:$0xff]
    %v265 = vld [vmem:[%s3 + $0x60] sm:$0xff]
    %v266 = vld [vmem:[%s3 + $0x68] sm:$0xff]
    %v267 = vld [vmem:[%s3 + $0x70] sm:$0xff]
    %v268 = vld [vmem:[%s3 + $0x78] sm:$0xff]
    %v269 = vld [vmem:[%s4] sm:$0x1]
    %v271 = vlaneseq
    %v272 = vshrl.u32 %v271, 7
    %v273 = vsub.s32 0, %v272
    %v274 = vrot.slane %v269, %v273
    %276 = vmatprep.subr.mxu0 0.0
    %277 = vmatpush1.msra.mxu0 %v253
    %278 = vmatprep.subr.mxu0 0.0
    %279 = vmatpush1.msra.mxu0 %v254
    %280 = vmatprep.subr.mxu0 0.0
    %281 = vmatpush1.msra.mxu0 %v255
    %282 = vmatprep.subr.mxu0 0.0
    %283 = vmatpush1.msra.mxu0 %v256
    %284 = vmatprep.subr.mxu0 0.0
    %285 = vmatpush1.msra.mxu0 %v257
    %286 = vmatprep.subr.mxu0 0.0
    %287 = vmatpush1.msra.mxu0 %v258
    %288 = vmatprep.subr.mxu0 0.0
    %289 = vmatpush1.msra.mxu0 %v259
    %290 = vmatprep.subr.mxu0 0.0
    %291 = vmatpush1.msra.mxu0 %v260
    %292 = vmatprep.subr.mxu0 0.0
    %293 = vmatpush1.msra.mxu0 %v261
    %294 = vmatprep.subr.mxu0 0.0
    %295 = vmatpush1.msra.mxu0 %v262
    %296 = vmatprep.subr.mxu0 0.0
    %297 = vmatpush1.msra.mxu0 %v263
    %298 = vmatprep.subr.mxu0 0.0
    %299 = vmatpush1.msra.mxu0 %v264
    %300 = vmatprep.subr.mxu0 0.0
    %301 = vmatpush1.msra.mxu0 %v265
    %302 = vmatprep.subr.mxu0 0.0
    %303 = vmatpush1.msra.mxu0 %v266
    %304 = vmatprep.subr.mxu0 0.0
    %305 = vmatpush1.msra.mxu0 %v267
    %306 = vmatprep.subr.mxu0 0.0
    %307 = vmatpush1.msra.mxu0 %v268
    %308 = vmatprep.subr.mxu0 0.0
    %309 = vmatpush1.msra.mxu0 0.0
    %310 = vmatprep.subr.mxu0 0.0
    %311 = vmatpush1.msra.mxu0 0.0
    %312 = vmatprep.subr.mxu0 0.0
    %313 = vmatpush1.msra.mxu0 0.0
    %314 = vmatprep.subr.mxu0 0.0
    %315 = vmatpush1.msra.mxu0 0.0
    %316 = vmatprep.subr.mxu0 0.0
    %317 = vmatpush1.msra.mxu0 0.0
    %318 = vmatprep.subr.mxu0 0.0
    %319 = vmatpush1.msra.mxu0 0.0
    %320 = vmatprep.subr.mxu0 0.0
    %321 = vmatpush1.msra.mxu0 0.0
    %322 = vmatprep.subr.mxu0 0.0
    %323 = vmatpush1.msra.mxu0 0.0
    %324 = vmatprep.subr.mxu0 0.0
    %325 = vmatpush1.msra.mxu0 0.0
    %326 = vmatprep.subr.mxu0 0.0
    %327 = vmatpush1.msra.mxu0 0.0
    %328 = vmatprep.subr.mxu0 0.0
    %329 = vmatpush1.msra.mxu0 0.0
    %330 = vmatprep.subr.mxu0 0.0
    %331 = vmatpush1.msra.mxu0 0.0
    %332 = vmatprep.subr.mxu0 0.0
    %333 = vmatpush1.msra.mxu0 0.0
    %334 = vmatprep.subr.mxu0 0.0
    %335 = vmatpush1.msra.mxu0 0.0
    %336 = vmatprep.subr.mxu0 0.0
    %337 = vmatpush1.msra.mxu0 0.0
    %338 = vmatprep.subr.mxu0 0.0
    %339 = vmatpush1.msra.mxu0 0.0
    %340 = vmatprep.mubr.f32.mxu0 0.0
    %341 = vmatmul.mubr.f32.gmra.mrb[0].mxu0 %v252
    %v342 = vpop.f32.mrb[0].mxu0
    %v343 = vadd.f32 %v274, %v342
    %v344 = vpop.f32.mrb[0].mxu0
    %345 = vdwg.mxu0
    %v346 = vmax.f32 %v343, 0.0
    %v347 = vld [vmem:[%s5] sm:$0xff]
    %v348 = vld [vmem:[%s5 + $0x8] sm:$0xff]
    %v349 = vld [vmem:[%s5 + $0x10] sm:$0xff]
    %v350 = vld [vmem:[%s5 + $0x18] sm:$0xff]
    %v351 = vld [vmem:[%s5 + $0x20] sm:$0xff]
    %v352 = vld [vmem:[%s5 + $0x28] sm:$0xff]
    %v353 = vld [vmem:[%s5 + $0x30] sm:$0xff]
    %v354 = vld [vmem:[%s5 + $0x38] sm:$0xff]
    %v355 = vld [vmem:[%s5 + $0x40] sm:$0xff]
    %v356 = vld [vmem:[%s5 + $0x48] sm:$0xff]
    %v357 = vld [vmem:[%s5 + $0x50] sm:$0xff]
    %v358 = vld [vmem:[%s5 + $0x58] sm:$0xff]
    %v359 = vld [vmem:[%s5 + $0x60] sm:$0xff]
    %v360 = vld [vmem:[%s5 + $0x68] sm:$0xff]
    %v361 = vld [vmem:[%s5 + $0x70] sm:$0xff]
    %v362 = vld [vmem:[%s5 + $0x78] sm:$0xff]
    %v363 = vld [vmem:[%s6] sm:$0x1]
    %v365 = vlaneseq
    %v366 = vshrl.u32 %v365, 7
    %v367 = vsub.s32 0, %v366
    %v368 = vrot.slane %v363, %v367
    %370 = vmatprep.subr.mxu0 0.0
    %371 = vmatpush1.msra.mxu0 %v347
    %372 = vmatprep.subr.mxu0 0.0
    %373 = vmatpush1.msra.mxu0 %v348
    %374 = vmatprep.subr.mxu0 0.0
    %375 = vmatpush1.msra.mxu0 %v349
    %376 = vmatprep.subr.mxu0 0.0
    %377 = vmatpush1.msra.mxu0 %v350
    %378 = vmatprep.subr.mxu0 0.0
    %379 = vmatpush1.msra.mxu0 %v351
    %380 = vmatprep.subr.mxu0 0.0
    %381 = vmatpush1.msra.mxu0 %v352
    %382 = vmatprep.subr.mxu0 0.0
    %383 = vmatpush1.msra.mxu0 %v353
    %384 = vmatprep.subr.mxu0 0.0
    %385 = vmatpush1.msra.mxu0 %v354
    %386 = vmatprep.subr.mxu0 0.0
    %387 = vmatpush1.msra.mxu0 %v355
    %388 = vmatprep.subr.mxu0 0.0
    %389 = vmatpush1.msra.mxu0 %v356
    %390 = vmatprep.subr.mxu0 0.0
    %391 = vmatpush1.msra.mxu0 %v357
    %392 = vmatprep.subr.mxu0 0.0
    %393 = vmatpush1.msra.mxu0 %v358
    %394 = vmatprep.subr.mxu0 0.0
    %395 = vmatpush1.msra.mxu0 %v359
    %396 = vmatprep.subr.mxu0 0.0
    %397 = vmatpush1.msra.mxu0 %v360
    %398 = vmatprep.subr.mxu0 0.0
    %399 = vmatpush1.msra.mxu0 %v361
    %400 = vmatprep.subr.mxu0 0.0
    %401 = vmatpush1.msra.mxu0 %v362
    %402 = vmatprep.subr.mxu0 0.0
    %403 = vmatpush1.msra.mxu0 0.0
    %404 = vmatprep.subr.mxu0 0.0
    %405 = vmatpush1.msra.mxu0 0.0
    %406 = vmatprep.subr.mxu0 0.0
    %407 = vmatpush1.msra.mxu0 0.0
    %408 = vmatprep.subr.mxu0 0.0
    %409 = vmatpush1.msra.mxu0 0.0
    %410 = vmatprep.subr.mxu0 0.0
    %411 = vmatpush1.msra.mxu0 0.0
    %412 = vmatprep.subr.mxu0 0.0
    %413 = vmatpush1.msra.mxu0 0.0
    %414 = vmatprep.subr.mxu0 0.0
    %415 = vmatpush1.msra.mxu0 0.0
    %416 = vmatprep.subr.mxu0 0.0
    %417 = vmatpush1.msra.mxu0 0.0
    %418 = vmatprep.subr.mxu0 0.0
    %419 = vmatpush1.msra.mxu0 0.0
    %420 = vmatprep.subr.mxu0 0.0
    %421 = vmatpush1.msra.mxu0 0.0
    %422 = vmatprep.subr.mxu0 0.0
    %423 = vmatpush1.msra.mxu0 0.0
    %424 = vmatprep.subr.mxu0 0.0
    %425 = vmatpush1.msra.mxu0 0.0
    %426 = vmatprep.subr.mxu0 0.0
    %427 = vmatpush1.msra.mxu0 0.0
    %428 = vmatprep.subr.mxu0 0.0
    %429 = vmatpush1.msra.mxu0 0.0
    %430 = vmatprep.subr.mxu0 0.0
    %431 = vmatpush1.msra.mxu0 0.0
    %432 = vmatprep.subr.mxu0 0.0
    %433 = vmatpush1.msra.mxu0 0.0
    %434 = vmatprep.mubr.f32.mxu0 0.0
    %435 = vmatmul.mubr.f32.gmra.mrb[0].mxu0 %v346
    %v436 = vpop.f32.mrb[0].mxu0
    %v437 = vadd.f32 %v368, %v436
    %v438 = vpop.f32.mrb[0].mxu0
    %439 = vdwg.mxu0
    %440 = vst [vmem:[#allocation2] sm:$0x3] %v346
    %441 = vst [vmem:[#allocation4] sm:$0x3] %v437
    // Predicated region
    $region30: #{cnn_cifar_forward.5} parent=1 // pred_check
      _
    $region31: #{cnn_cifar_forward.5} parent=1 // pred_check_branch
      %443 = sbr.rel (0) target = $region33
    $region32: #{cnn_cifar_forward.5} parent=1 // pred_region
      %s445 = ssub.s32 32, 32
      %446 = vsyncadd [#allocation3], %s445
      %s448 = sshll.u32 [#allocation2], 4
      %s449 = int_to_ptr.vmem [resolvable:$true] %s448
      %451 = dma.vmem_to_hbm [thread:$0]  %s449, 32, %s7, [#allocation3]
    $region33: #{cnn_cifar_forward.5} parent=1 // pred_fallthru
      _
    // Predicated region
    $region34: #{cnn_cifar_forward.5} parent=1 // pred_check
      _
    $region35: #{cnn_cifar_forward.5} parent=1 // pred_check_branch
      %453 = sbr.rel (0) target = $region37
    $region36: #{cnn_cifar_forward.5} parent=1 // pred_region
      %s455 = ssub.s32 32, 32
      %456 = vsyncadd [#allocation5], %s455
      %s458 = sshll.u32 [#allocation4], 4
      %s459 = int_to_ptr.vmem [resolvable:$true] %s458
      %461 = dma.vmem_to_hbm [thread:$0]  %s459, 32, %s8, [#allocation5]
    $region37: #{cnn_cifar_forward.5} parent=1 // pred_fallthru
      _
    // Predicated region
    $region38: #{cnn_cifar_forward.5} parent=1 // pred_check
      _
    $region39: #{cnn_cifar_forward.5} parent=1 // pred_check_branch
      %463 = sbr.rel (0) target = $region41
    $region40: #{cnn_cifar_forward.5} parent=1 // pred_region
      %464 = dma.done [#allocation3], 32
    $region41: #{cnn_cifar_forward.5} parent=1 // pred_fallthru
      _
    // Predicated region
    $region42: #{cnn_cifar_forward.5} parent=1 // pred_check
      _
    $region43: #{cnn_cifar_forward.5} parent=1 // pred_check_branch
      %466 = sbr.rel (0) target = $region45
    $region44: #{cnn_cifar_forward.5} parent=1 // pred_region
      %467 = dma.done [#allocation5], 32
    $region45: #{cnn_cifar_forward.5} parent=1 // pred_fallthru
      _
    %468 = vsyncpa [#allocation3], 1
    %469 = vsyncpa [#allocation5], 1

</llo_original>
